<compile_context>
chip_gen: v7x
topology: tpu7x:2x2x1
jax: 0.10.0
libtpu: 0.0.40
codegen_flags: <defaults>
</compile_context>

<pallas_src>
import math
import functools

import jax
import jax.numpy as jnp
from jax import lax
from jax.experimental import pallas as pl
from jax.experimental.pallas import tpu as pltpu
import numpy as np


# ----------------------------------------------------------------------------
# Tile choosers
# ----------------------------------------------------------------------------
def _pick_latents_tile(B):
    if B <= 2048:
        return B
    for tb in (2048, 1024, 512, 256, 128):
        if B % tb == 0:
            return tb
    return B


def _pick_sims_tile(B):
    # tb must be a multiple of 128 (lane-dense column-partial blocks) or == B.
    if B <= 512:
        return B
    for tb in (512, 384, 256, 128):
        if B % tb == 0:
            return tb
    return B


# ----------------------------------------------------------------------------
# Kernel 1: audio/text `to_latents` nn.Linear + l2norm.
# Two small MXU dots (no zero-padded block-diagonal weight), EUP rsqrt for the
# normalization, exp(temperature) folded into the bf16 audio latents.
# ----------------------------------------------------------------------------
def _latents_kernel(temp_ref, ae_ref, te_ref, wa_ref, ba_ref, wt_ref, bt_ref,
                    a16_ref, t16_ref, *f32_refs, emit_f32):
    f32 = jnp.float32
    a = jnp.dot(ae_ref[...].astype(f32), wa_ref[...],
                preferred_element_type=f32) + ba_ref[...]
    t = jnp.dot(te_ref[...].astype(f32), wt_ref[...],
                preferred_element_type=f32) + bt_ref[...]
    # l2norm == F.normalize(x, p=2, dim=-1, eps=1e-12), via EUP rsqrt:
    #   x * rsqrt(max(sum(x^2), eps^2)) == x / max(||x||, eps).
    a_n = a * lax.rsqrt(jnp.maximum(jnp.sum(a * a, axis=-1, keepdims=True), 1e-24))
    t_n = t * lax.rsqrt(jnp.maximum(jnp.sum(t * t, axis=-1, keepdims=True), 1e-24))
    # Fold exp(temperature) into the bf16 audio latents so the O(B^2) sims
    # kernel never rescales a (tb, tb) block.
    scale = jnp.exp(temp_ref[0, 0])
    a16_ref[...] = (a_n * scale).astype(jnp.bfloat16)
    t16_ref[...] = t_n.astype(jnp.bfloat16)
    if emit_f32:
        f32_refs[0][...] = a_n
        f32_refs[1][...] = t_n


def mulan_latents(temp, a_emb, t_emb, wa, ba, wt, bt, *, tile_b=None,
                  emit_f32=False):
    B, Da = a_emb.shape
    Bt, Dt = t_emb.shape
    E = wa.shape[1]
    assert Bt == B and wa.shape[0] == Da and wt.shape == (Dt, E)
    ba = ba.reshape(1, E).astype(jnp.float32)
    bt = bt.reshape(1, E).astype(jnp.float32)
    temp = temp.reshape(1, 1).astype(jnp.float32)

    tb = _pick_latents_tile(B) if tile_b is None else tile_b
    assert B % tb == 0 and (tb == B or tb % 8 == 0)

    lat_spec = pl.BlockSpec((tb, E), lambda i: (i, 0))
    out_shape = [jax.ShapeDtypeStruct((B, E), jnp.bfloat16),
                 jax.ShapeDtypeStruct((B, E), jnp.bfloat16)]
    out_specs = [lat_spec, lat_spec]
    if emit_f32:
        out_shape += [jax.ShapeDtypeStruct((B, E), jnp.float32)] * 2
        out_specs += [lat_spec, lat_spec]

    return pl.pallas_call(
        functools.partial(_latents_kernel, emit_f32=emit_f32),
        out_shape=tuple(out_shape),
        grid_spec=pltpu.PrefetchScalarGridSpec(
            num_scalar_prefetch=0,
            grid=(B // tb,),
            in_specs=[pl.BlockSpec(memory_space=pltpu.MemorySpace.SMEM),  # temperature
                      pl.BlockSpec((tb, Da), lambda i: (i, 0)),
                      pl.BlockSpec((tb, Dt), lambda i: (i, 0)),
                      pl.BlockSpec((Da, E), lambda i: (0, 0)),
                      pl.BlockSpec((1, E), lambda i: (0, 0)),
                      pl.BlockSpec((Dt, E), lambda i: (0, 0)),
                      pl.BlockSpec((1, E), lambda i: (0, 0))],
            out_specs=tuple(out_specs),
        ),
        compiler_params=pltpu.CompilerParams(
            dimension_semantics=("parallel",)),
    )(temp, a_emb, t_emb, wa, ba, wt, bt)


# ----------------------------------------------------------------------------
# Kernel 2: tiled exp(cosine sims * exp(temp)) partial reductions.
# grid = (nb_i "parallel", nb_j "arbitrary"); per step:
#   rowsum (tb,1)  accumulated across j in the resident output block (den_i,
#                  diagonal excluded)
#   pos    (tb,1)  written once per i on the diagonal block (numerator)
#   colpart(1,8,tb) column partial sums for (i,j) (diagonal excluded on i==j),
#                  replicated over 8 sublanes to keep the block (8,128)-tiled.
# The O(B) combine (logs + mean) happens in plain JAX afterwards.
# ----------------------------------------------------------------------------
def _sims_partials_kernel(a_ref, t_ref, rowsum_ref, pos_ref, colpart_ref,
                          *, tb, t_resident):
    f32 = jnp.float32
    i = pl.program_id(0)
    j = pl.program_id(1)

    if t_resident:
        t_blk = t_ref[pl.ds(pl.multiple_of(j * tb, tb), tb), :]
    else:
        t_blk = t_ref[...]

    # a is already scaled by exp(temperature) (folded in kernel 1):
    # s == cosine_sims * exp(temperature); bf16 MXU with f32 accumulation.
    s = lax.dot_general(a_ref[...], t_blk, (((1,), (1,)), ((), ())),
                        preferred_element_type=f32)
    e = jnp.exp(s)                                       # (tb, tb) f32

    @pl.when(j == 0)
    def _init_rows():
        rowsum_ref[...] = jnp.zeros_like(rowsum_ref)

    # TODO(synk): on v6e the MXU is underfed at K=128; if a bundle dump shows
    # XLU/EUP as the binding slot, move one of the reductions onto the idle MXU
    # (e.g. row sums as e @ ones((tb, 1)) with f32 accumulation).

    @pl.when(i != j)
    def _off_diag():
        rowsum_ref[...] += jnp.sum(e, axis=1, keepdims=True)
        cs = jnp.sum(e, axis=0, keepdims=True)                       # (1, tb)
        colpart_ref[...] = jnp.broadcast_to(cs, (1, 8, tb))

    @pl.when(i == j)
    def _diag():
        # Positives live only on the nb diagonal blocks; mask the diagonal
        # *before* summation (decoupled CL) so the denominators never suffer
        # the cancellation of subtracting the large positive afterwards.
        r = lax.broadcasted_iota(jnp.int32, (tb, tb), 0)
        c = lax.broadcasted_iota(jnp.int32, (tb, tb), 1)
        eye = r == c
        pos_ref[...] = jnp.sum(jnp.where(eye, e, 0.0), axis=1, keepdims=True)
        em = jnp.where(eye, 0.0, e)
        rowsum_ref[...] += jnp.sum(em, axis=1, keepdims=True)
        cs = jnp.sum(em, axis=0, keepdims=True)
        colpart_ref[...] = jnp.broadcast_to(cs, (1, 8, tb))


def mulan_softmax_cl_loss(a_lat16, t_lat16, *, tile_b=None,
                          t_resident_bytes=8 << 20):
    B, E = a_lat16.shape
    assert t_lat16.shape == (B, E)
    tb = _pick_sims_tile(B) if tile_b is None else tile_b
    assert B % tb == 0
    assert tb == B or tb % 128 == 0, (
        "sims tile must be a multiple of 128 (lane-dense column partials) "
        "or equal the batch")
    nb = B // tb

    # Keep the whole t matrix VMEM-resident (single DMA) when it fits the
    # budget; otherwise stream (tb, E) blocks with a 3-deep pipeline (v5e).
    t_resident = (B * E * 2) <= t_resident_bytes
    if t_resident:
        t_spec = pl.BlockSpec((B, E), lambda i, j: (0, 0))
    else:
        t_spec = pl.BlockSpec((tb, E), lambda i, j: (j, 0),
                              pipeline_mode=pl.Buffered(3))

    # VMEM working-set estimate; only raise the scoped limit above the default
    # (16 MiB v5e / 32 MiB v6e+v7x) when actually needed.  v7x only has 64 MiB
    # physical VMEM per TensorCore, so keep tiles <= 512 there.
    est = ((B * E * 2 if t_resident else 3 * tb * E * 2)   # t
           + 2 * tb * E * 2                                # a (double-buffered)
           + 2 * 2 * tb * 128 * 4                          # rowsum/pos blocks (lane-padded)
           + 2 * 8 * tb * 4                                # colpart blocks
           + 2 * tb * tb * 4)                              # s / exp(s) intermediates
    vmem_limit = (None if est <= (12 << 20)
                  else min(int(est * 3 // 2) + (4 << 20), 100 << 20))

    rowsum, pos, colpart = pl.pallas_call(
        functools.partial(_sims_partials_kernel, tb=tb, t_resident=t_resident),
        out_shape=(jax.ShapeDtypeStruct((B, 1), jnp.float32),       # den_i
                   jax.ShapeDtypeStruct((B, 1), jnp.float32),       # positives
                   jax.ShapeDtypeStruct((nb, 8, B), jnp.float32)),  # col partials
        grid_spec=pltpu.PrefetchScalarGridSpec(
            num_scalar_prefetch=0,
            grid=(nb, nb),
            in_specs=[pl.BlockSpec((tb, E), lambda i, j: (i, 0)), t_spec],
            out_specs=(pl.BlockSpec((tb, 1), lambda i, j: (i, 0)),
                       pl.BlockSpec((tb, 1), lambda i, j: (i, 0)),
                       pl.BlockSpec((1, 8, tb), lambda i, j: (i, 0, j))),
        ),
        # Row-block axis is fully independent -> "parallel" (shards across both
        # TensorCores on v7x); the inner column sweep carries the accumulators.
        compiler_params=pltpu.CompilerParams(
            dimension_semantics=("parallel", "arbitrary"),
            vmem_limit_bytes=vmem_limit),
    )(a_lat16, t_lat16)

    # O(B) combine epilogue in plain JAX (negligible vs the O(B^2) kernel).
    def _log(x):  # lucidrains' log(t) = log(clamp(t, min=1e-20))
        return jnp.log(jnp.maximum(x, 1e-20))

    num = pos[:, 0]
    den_i = rowsum[:, 0]
    den_j = jnp.sum(colpart[:, 0, :], axis=0)
    return jnp.mean(-_log(num) + 0.5 * (_log(den_i) + _log(den_j)))


def mulan_forward(temp, audio_embeds, text_embeds, wa, ba, wt, bt, *,
                  return_latents=False, sims_tile=None, latents_tile=None):
    """MuLaN default forward: scalar decoupled softmax contrastive loss.

    return_latents=True mirrors MuLaN.forward(return_latents=True): returns the
    l2-normalized f32 (audio_latents, text_latents) instead of the loss.
    """
    if return_latents:
        _, _, a_lat, t_lat = mulan_latents(
            temp, audio_embeds, text_embeds, wa, ba, wt, bt,
            tile_b=latents_tile, emit_f32=True)
        return a_lat, t_lat
    a16, t16 = mulan_latents(
        temp, audio_embeds, text_embeds, wa, ba, wt, bt,
        tile_b=latents_tile, emit_f32=False)
    return mulan_softmax_cl_loss(a16, t16, tile_b=sims_tile)


# ----------------------------------------------------------------------------
# Stand-in "transformers" (plain JAX glue; deterministic parameters)
# TODO(synk): AudioTransformer / TextTransformer are external modules not
#             defined in the source file; replaced with deterministic
#             featurizers producing (B, dim) embeddings.
# ----------------------------------------------------------------------------
def audio_transformer_stub(wavs, w, b, frame=64):
    B, L = wavs.shape
    feats = jnp.mean(wavs.reshape(B, L // frame, frame), axis=1)   # (B, frame)
    return jnp.tanh(feats @ w + b)                                 # (B, audio_dim)


def text_transformer_stub(tokens, emb_table):
    embs = jnp.take(emb_table, tokens, axis=0)                     # (B, S, text_dim)
    return jnp.tanh(jnp.mean(embs, axis=1))                        # (B, text_dim)


# ----------------------------------------------------------------------------
# Pure-JAX references (f32, and bf16-sims-mimicking) for correctness checks
# ----------------------------------------------------------------------------
def reference_forward(temp, a_emb, t_emb, wa, ba, wt, bt, mimic_bf16_sims=False):
    hi = jax.lax.Precision.HIGHEST

    def l2norm(x):
        n = jnp.sqrt(jnp.sum(x * x, axis=-1, keepdims=True))
        return x / jnp.maximum(n, 1e-12)

    a_lat = l2norm(jnp.dot(a_emb, wa, precision=hi) + ba.reshape(1, -1))
    t_lat = l2norm(jnp.dot(t_emb, wt, precision=hi) + bt.reshape(1, -1))
    scale = jnp.exp(temp.reshape(()))
    if mimic_bf16_sims:
        a_s = (a_lat * scale).astype(jnp.bfloat16)
        t_s = t_lat.astype(jnp.bfloat16)
        sims = jnp.dot(a_s, t_s.T, preferred_element_type=jnp.float32)
    else:
        sims = jnp.dot(a_lat, t_lat.T, precision=hi) * scale
    e = jnp.exp(sims)
    B = e.shape[0]
    eye = jnp.eye(B, dtype=bool)
    num = jnp.sum(jnp.where(eye, e, 0.0), axis=1)
    masked = jnp.where(eye, 0.0, e)
    den_i = jnp.sum(masked, axis=1)
    den_j = jnp.sum(masked, axis=0)
    log = lambda x: jnp.log(jnp.maximum(x, 1e-20))
    loss = jnp.mean(-log(num) + 0.5 * (log(den_i) + log(den_j)))
    return loss, a_lat, t_lat


# ----------------------------------------------------------------------------
if __name__ == "__main__":
    B = 256            # contrastive batch
    WAV_LEN = 1024     # raw audio samples
    SEQ = 16           # text tokens
    VOCAB = 256
    AUDIO_DIM = 32     # audio_transformer.dim
    TEXT_DIM = 32      # text_transformer.dim
    DIM_LATENT = 128   # MuLaN default
    SIMS_TILE = 128    # -> (2, 2) grid over the (B, B) similarity matrix

    key = jax.random.PRNGKey(0)
    ks = jax.random.split(key, 10)

    # inputs
    wavs = jax.random.normal(ks[0], (B, WAV_LEN), dtype=jnp.float32)
    texts = jax.random.randint(ks[1], (B, SEQ), 0, VOCAB, dtype=jnp.int32)

    # stand-in transformer params (deterministic)
    w_audio_feat = 0.1 * jax.random.normal(ks[2], (64, AUDIO_DIM), jnp.float32)
    b_audio_feat = 0.1 * jax.random.normal(ks[3], (AUDIO_DIM,), jnp.float32)
    text_emb_table = 0.1 * jax.random.normal(ks[4], (VOCAB, TEXT_DIM), jnp.float32)

    # MuLaN params: audio_to_latents / text_to_latents nn.Linear, temperature=log(10)
    w_a = (1.0 / math.sqrt(AUDIO_DIM)) * jax.random.normal(
        ks[5], (AUDIO_DIM, DIM_LATENT), jnp.float32)
    b_a = (1.0 / math.sqrt(AUDIO_DIM)) * jax.random.normal(
        ks[6], (1, DIM_LATENT), jnp.float32)
    w_t = (1.0 / math.sqrt(TEXT_DIM)) * jax.random.normal(
        ks[7], (TEXT_DIM, DIM_LATENT), jnp.float32)
    b_t = (1.0 / math.sqrt(TEXT_DIM)) * jax.random.normal(
        ks[8], (1, DIM_LATENT), jnp.float32)
    temperature = jnp.full((1, 1), math.log(10.0), dtype=jnp.float32)

    # "transformers" (glue)
    audio_embeds = audio_transformer_stub(wavs, w_audio_feat, b_audio_feat)
    text_embeds = text_transformer_stub(texts, text_emb_table)

    # fused Pallas kernels: default path (loss) and return_latents path
    loss = mulan_forward(temperature, audio_embeds, text_embeds,
                         w_a, b_a, w_t, b_t, sims_tile=SIMS_TILE)
    a_lat, t_lat = mulan_forward(temperature, audio_embeds, text_embeds,
                                 w_a, b_a, w_t, b_t, return_latents=True)
    jax.block_until_ready((loss, a_lat, t_lat))

    # correctness checks
    ref_loss_f32, ref_a, ref_t = reference_forward(
        temperature, audio_embeds, text_embeds, w_a, b_a, w_t, b_t,
        mimic_bf16_sims=False)
    ref_loss_b16, _, _ = reference_forward(
        temperature, audio_embeds, text_embeds, w_a, b_a, w_t, b_t,
        mimic_bf16_sims=True)

    np.testing.assert_allclose(np.asarray(a_lat), np.asarray(ref_a),
                               rtol=2e-3, atol=2e-3)
    np.testing.assert_allclose(np.asarray(t_lat), np.asarray(ref_t),
                               rtol=2e-3, atol=2e-3)
    # tight check against a reference that mimics the bf16 sims matmul ...
    np.testing.assert_allclose(float(loss), float(ref_loss_b16),
                               rtol=2e-3, atol=2e-3)
    # ... and a looser check against pure-f32 module semantics.
    np.testing.assert_allclose(float(loss), float(ref_loss_f32),
                               rtol=2e-2, atol=2e-2)

    print("KERNEL_OK")
</pallas_src>

<mosaic_0001>
module attributes {stable_mosaic.version = 11 : i64} {
  func.func @_latents_kernel(%arg0: i32, %arg1: memref<1x1xf32, #tpu.memory_space<smem>>, %arg2: memref<256x32xf32, #tpu.memory_space<vmem>>, %arg3: memref<256x32xf32, #tpu.memory_space<vmem>>, %arg4: memref<32x128xf32, #tpu.memory_space<vmem>>, %arg5: memref<1x128xf32, #tpu.memory_space<vmem>>, %arg6: memref<32x128xf32, #tpu.memory_space<vmem>>, %arg7: memref<1x128xf32, #tpu.memory_space<vmem>>, %arg8: memref<256x128xbf16, #tpu.memory_space<vmem>>, %arg9: memref<256x128xbf16, #tpu.memory_space<vmem>>) attributes {dimension_semantics = [#tpu.dimension_semantics<parallel>], iteration_bounds = array<i64: 1>, scalar_prefetch = 0 : i64, scratch_operands = 0 : i64, tpu.core_type = #tpu.core_type<tc>, window_params = [{transform_indices = @transform_0, window_bounds = array<i64: 1, 1>}, {transform_indices = @transform_1, window_bounds = array<i64: 256, 32>}, {transform_indices = @transform_2, window_bounds = array<i64: 256, 32>}, {pipeline_mode = #tpu.pipeline_mode<synchronous>, transform_indices = @transform_3, window_bounds = array<i64: 32, 128>}, {pipeline_mode = #tpu.pipeline_mode<synchronous>, transform_indices = @transform_4, window_bounds = array<i64: 1, 128>}, {pipeline_mode = #tpu.pipeline_mode<synchronous>, transform_indices = @transform_5, window_bounds = array<i64: 32, 128>}, {pipeline_mode = #tpu.pipeline_mode<synchronous>, transform_indices = @transform_6, window_bounds = array<i64: 1, 128>}, {transform_indices = @transform_7, window_bounds = array<i64: 256, 128>}, {transform_indices = @transform_8, window_bounds = array<i64: 256, 128>}]} {
    %c0 = arith.constant 0 : index
    %c0_0 = arith.constant 0 : index
    %0 = vector.load %arg2[%c0, %c0_0] : memref<256x32xf32, #tpu.memory_space<vmem>>, vector<256x32xf32>
    %c0_1 = arith.constant 0 : index
    %c0_2 = arith.constant 0 : index
    %1 = vector.load %arg4[%c0_1, %c0_2] : memref<32x128xf32, #tpu.memory_space<vmem>>, vector<32x128xf32>
    %cst = arith.constant dense<0.000000e+00> : vector<256x128xf32>
    %2 = tpu.matmul %0, %1, %cst {dimension_numbers = #tpu.dot_dimension_numbers<[1], [0], [0], [1], [0, 0, 1, 1], [], []>} : vector<256x32xf32>, vector<32x128xf32>, vector<256x128xf32> -> vector<256x128xf32>
    %c0_3 = arith.constant 0 : index
    %c0_4 = arith.constant 0 : index
    %3 = vector.load %arg5[%c0_3, %c0_4] : memref<1x128xf32, #tpu.memory_space<vmem>>, vector<1x128xf32>
    %4 = vector.broadcast %3 : vector<1x128xf32> to vector<256x128xf32>
    %5 = arith.addf %2, %4 : vector<256x128xf32>
    %c0_5 = arith.constant 0 : index
    %c0_6 = arith.constant 0 : index
    %6 = vector.load %arg3[%c0_5, %c0_6] : memref<256x32xf32, #tpu.memory_space<vmem>>, vector<256x32xf32>
    %c0_7 = arith.constant 0 : index
    %c0_8 = arith.constant 0 : index
    %7 = vector.load %arg6[%c0_7, %c0_8] : memref<32x128xf32, #tpu.memory_space<vmem>>, vector<32x128xf32>
    %cst_9 = arith.constant dense<0.000000e+00> : vector<256x128xf32>
    %8 = tpu.matmul %6, %7, %cst_9 {dimension_numbers = #tpu.dot_dimension_numbers<[1], [0], [0], [1], [0, 0, 1, 1], [], []>} : vector<256x32xf32>, vector<32x128xf32>, vector<256x128xf32> -> vector<256x128xf32>
    %c0_10 = arith.constant 0 : index
    %c0_11 = arith.constant 0 : index
    %9 = vector.load %arg7[%c0_10, %c0_11] : memref<1x128xf32, #tpu.memory_space<vmem>>, vector<1x128xf32>
    %10 = vector.broadcast %9 : vector<1x128xf32> to vector<256x128xf32>
    %11 = arith.addf %8, %10 : vector<256x128xf32>
    %12 = arith.mulf %5, %5 : vector<256x128xf32>
    %cst_12 = arith.constant dense<0.000000e+00> : vector<256xf32>
    %13 = vector.multi_reduction <add>, %12, %cst_12 [1] : vector<256x128xf32> to vector<256xf32>
    %14 = vector.shape_cast %13 : vector<256xf32> to vector<256x1xf32>
    %cst_13 = arith.constant 1.000000e-24 : f32
    %15 = vector.broadcast %cst_13 : f32 to vector<256x1xf32>
    %16 = arith.maximumf %14, %15 : vector<256x1xf32>
    %17 = math.rsqrt %16 : vector<256x1xf32>
    %18 = vector.broadcast %17 : vector<256x1xf32> to vector<256x128xf32>
    %19 = arith.mulf %5, %18 : vector<256x128xf32>
    %20 = arith.mulf %11, %11 : vector<256x128xf32>
    %cst_14 = arith.constant dense<0.000000e+00> : vector<256xf32>
    %21 = vector.multi_reduction <add>, %20, %cst_14 [1] : vector<256x128xf32> to vector<256xf32>
    %22 = vector.shape_cast %21 : vector<256xf32> to vector<256x1xf32>
    %cst_15 = arith.constant 1.000000e-24 : f32
    %23 = vector.broadcast %cst_15 : f32 to vector<256x1xf32>
    %24 = arith.maximumf %22, %23 : vector<256x1xf32>
    %25 = math.rsqrt %24 : vector<256x1xf32>
    %26 = vector.broadcast %25 : vector<256x1xf32> to vector<256x128xf32>
    %27 = arith.mulf %11, %26 : vector<256x128xf32>
    %c0_16 = arith.constant 0 : index
    %c0_17 = arith.constant 0 : index
    %28 = memref.load %arg1[%c0_16, %c0_17] : memref<1x1xf32, #tpu.memory_space<smem>>
    %29 = math.exp %28 : f32
    %30 = vector.broadcast %29 : f32 to vector<256x128xf32>
    %31 = arith.mulf %19, %30 : vector<256x128xf32>
    %32 = arith.truncf %31 : vector<256x128xf32> to vector<256x128xbf16>
    %c0_18 = arith.constant 0 : index
    %c0_19 = arith.constant 0 : index
    %33 = vector.load %arg8[%c0_18, %c0_19] : memref<256x128xbf16, #tpu.memory_space<vmem>>, vector<256x128xbf16>
    tpu.vector_store %arg8[%c0_18, %c0_19], %32 {strides = array<i32>} : memref<256x128xbf16, #tpu.memory_space<vmem>>, vector<256x128xbf16>,
    %34 = arith.truncf %27 : vector<256x128xf32> to vector<256x128xbf16>
    %c0_20 = arith.constant 0 : index
    %c0_21 = arith.constant 0 : index
    %35 = vector.load %arg9[%c0_20, %c0_21] : memref<256x128xbf16, #tpu.memory_space<vmem>>, vector<256x128xbf16>
    tpu.vector_store %arg9[%c0_20, %c0_21], %34 {strides = array<i32>} : memref<256x128xbf16, #tpu.memory_space<vmem>>, vector<256x128xbf16>,
    return
  }
  func.func @transform_0(%arg0: i32) -> (i32, i32) {
    %c0_i32 = arith.constant 0 : i32
    %c0_i32_0 = arith.constant 0 : i32
    %c0_i32_1 = arith.constant 0 : i32
    return %c0_i32, %c0_i32_0 : i32, i32
  }
  func.func @transform_1(%arg0: i32) -> (i32, i32) {
    %c0_i32 = arith.constant 0 : i32
    %c0_i32_0 = arith.constant 0 : i32
    return %arg0, %c0_i32 : i32, i32
  }
  func.func @transform_2(%arg0: i32) -> (i32, i32) {
    %c0_i32 = arith.constant 0 : i32
    %c0_i32_0 = arith.constant 0 : i32
    return %arg0, %c0_i32 : i32, i32
  }
  func.func @transform_3(%arg0: i32) -> (i32, i32) {
    %c0_i32 = arith.constant 0 : i32
    %c0_i32_0 = arith.constant 0 : i32
    %c0_i32_1 = arith.constant 0 : i32
    return %c0_i32, %c0_i32_0 : i32, i32
  }
  func.func @transform_4(%arg0: i32) -> (i32, i32) {
    %c0_i32 = arith.constant 0 : i32
    %c0_i32_0 = arith.constant 0 : i32
    %c0_i32_1 = arith.constant 0 : i32
    return %c0_i32, %c0_i32_0 : i32, i32
  }
  func.func @transform_5(%arg0: i32) -> (i32, i32) {
    %c0_i32 = arith.constant 0 : i32
    %c0_i32_0 = arith.constant 0 : i32
    %c0_i32_1 = arith.constant 0 : i32
    return %c0_i32, %c0_i32_0 : i32, i32
  }
  func.func @transform_6(%arg0: i32) -> (i32, i32) {
    %c0_i32 = arith.constant 0 : i32
    %c0_i32_0 = arith.constant 0 : i32
    %c0_i32_1 = arith.constant 0 : i32
    return %c0_i32, %c0_i32_0 : i32, i32
  }
  func.func @transform_7(%arg0: i32) -> (i32, i32) {
    %c0_i32 = arith.constant 0 : i32
    %c0_i32_0 = arith.constant 0 : i32
    return %arg0, %c0_i32 : i32, i32
  }
  func.func @transform_8(%arg0: i32) -> (i32, i32) {
    %c0_i32 = arith.constant 0 : i32
    %c0_i32_0 = arith.constant 0 : i32
    return %arg0, %c0_i32 : i32, i32
  }
}

</mosaic_0001>

<llo_original>
// kernel: tpu_custom_call.1
$region0: #{tpu_custom_call.1}
  #allocation0 [shape = 'u32[]', space=smem, size = 0x4, offset = 0x4, fixed_abs, tag = 'smem constant byte address 0x4 - core index']
  #allocation1 [shape = 'u32[144,128]{1,0:T(1,128)}', space=vmem, size = 0x12000, scoped, tag = 'internal scratch']
  #allocation2 [shape = 'f32[1,1]{1,0:T(1,128)S(6)}', space=smem, size = 0x200, scoped, tag = 'scoped memory for tpu_custom_call.1']
  %s0 = inlined_call_operand.<no memory space> [shape: f32[1,1], index: 0, kind: input, shape index: {}]
  %s1 = inlined_call_operand.vmem [shape: f32[256,32], index: 1, kind: input, shape index: {}]
  %s2 = inlined_call_operand.vmem [shape: f32[256,32], index: 2, kind: input, shape index: {}]
  %s3 = inlined_call_operand.vmem [shape: f32[32,128], index: 3, kind: input, shape index: {}]
  %s4 = inlined_call_operand.vmem [shape: f32[1,128], index: 4, kind: input, shape index: {}]
  %s5 = inlined_call_operand.vmem [shape: f32[32,128], index: 5, kind: input, shape index: {}]
  %s6 = inlined_call_operand.vmem [shape: f32[1,128], index: 6, kind: input, shape index: {}]
  %s7 = inlined_call_operand.hbm [shape: bf16[256,128], index: 7, kind: output, shape index: {0}]
  %s8 = inlined_call_operand.hbm [shape: bf16[256,128], index: 8, kind: output, shape index: {1}]
  %9 = xla_tuple %s7, %s8
  %s10 = sld [smem:[#allocation0]]
  $region46: #{tpu_custom_call.1} parent=0
    _
  %s12 = ssub.s32 1, %s10
  %s13 = scalar_select 0, %s12, %s10
  %14 = sst [smem:[#allocation2]] %s0
  $region1: #{tpu_custom_call.1} parent=0
    #allocation3 [shape = 'u8[65536]{0}', space=vmem, size = 0x10000, scoped, tag = 'output window, operand 0, single buffered']
    #allocation4 [shape = 's32[1]{0}', space=sflag, size = 0x4, scoped, tag = 'scoped memory for tpu_custom_call.1']
    #allocation5 [shape = 'u8[65536]{0}', space=vmem, size = 0x10000, scoped, tag = 'output window, operand 1, single buffered']
    #allocation6 [shape = 's32[1]{0}', space=sflag, size = 0x4, scoped, tag = 'scoped memory for tpu_custom_call.1']
    %15 = vsyncpa [#allocation4], 0
    %16 = vsyncpa [#allocation6], 0
    // Predicated region
    $region2: #{tpu_custom_call.1} parent=1 // pred_check
      _
    $region3: #{tpu_custom_call.1} parent=1 // pred_check_branch
      %18 = sbr.rel (0) target = $region5
    $region4: #{tpu_custom_call.1} parent=1 // pred_region
      _
    $region5: #{tpu_custom_call.1} parent=1 // pred_fallthru
      _
    // Predicated region
    $region6: #{tpu_custom_call.1} parent=1 // pred_check
      _
    $region7: #{tpu_custom_call.1} parent=1 // pred_check_branch
      %20 = sbr.rel (0) target = $region9
    $region8: #{tpu_custom_call.1} parent=1 // pred_region
      _
    $region9: #{tpu_custom_call.1} parent=1 // pred_fallthru
      _
    // Predicated region
    $region10: #{tpu_custom_call.1} parent=1 // pred_check
      _
    $region11: #{tpu_custom_call.1} parent=1 // pred_check_branch
      %22 = sbr.rel (0) target = $region13
    $region12: #{tpu_custom_call.1} parent=1 // pred_region
      _
    $region13: #{tpu_custom_call.1} parent=1 // pred_fallthru
      _
    // Predicated region
    $region14: #{tpu_custom_call.1} parent=1 // pred_check
      _
    $region15: #{tpu_custom_call.1} parent=1 // pred_check_branch
      %24 = sbr.rel (0) target = $region17
    $region16: #{tpu_custom_call.1} parent=1 // pred_region
      _
    $region17: #{tpu_custom_call.1} parent=1 // pred_fallthru
      _
    // Predicated region
    $region18: #{tpu_custom_call.1} parent=1 // pred_check
      _
    $region19: #{tpu_custom_call.1} parent=1 // pred_check_branch
      %26 = sbr.rel (0) target = $region21
    $region20: #{tpu_custom_call.1} parent=1 // pred_region
      _
    $region21: #{tpu_custom_call.1} parent=1 // pred_fallthru
      _
    // Predicated region
    $region22: #{tpu_custom_call.1} parent=1 // pred_check
      _
    $region23: #{tpu_custom_call.1} parent=1 // pred_check_branch
      %28 = sbr.rel (0) target = $region25
    $region24: #{tpu_custom_call.1} parent=1 // pred_region
      _
    $region25: #{tpu_custom_call.1} parent=1 // pred_fallthru
      _
    // Predicated region
    $region26: #{tpu_custom_call.1} parent=1 // pred_check
      _
    $region27: #{tpu_custom_call.1} parent=1 // pred_check_branch
      %30 = sbr.rel (0) target = $region29
    $region28: #{tpu_custom_call.1} parent=1 // pred_region
      _
    $region29: #{tpu_custom_call.1} parent=1 // pred_fallthru
      _
    %v31 = vld [vmem:[%s1] sm:$0xff]
    %v32 = vld [vmem:[%s1 + $0x8] sm:$0xff]
    %v33 = vld [vmem:[%s1 + $0x10] sm:$0xff]
    %v34 = vld [vmem:[%s1 + $0x18] sm:$0xff]
    %v35 = vld [vmem:[%s1 + $0x20] sm:$0xff]
    %v36 = vld [vmem:[%s1 + $0x28] sm:$0xff]
    %v37 = vld [vmem:[%s1 + $0x30] sm:$0xff]
    %v38 = vld [vmem:[%s1 + $0x38] sm:$0xff]
    %v39 = vld [vmem:[%s1 + $0x40] sm:$0xff]
    %v40 = vld [vmem:[%s1 + $0x48] sm:$0xff]
    %v41 = vld [vmem:[%s1 + $0x50] sm:$0xff]
    %v42 = vld [vmem:[%s1 + $0x58] sm:$0xff]
    %v43 = vld [vmem:[%s1 + $0x60] sm:$0xff]
    %v44 = vld [vmem:[%s1 + $0x68] sm:$0xff]
    %v45 = vld [vmem:[%s1 + $0x70] sm:$0xff]
    %v46 = vld [vmem:[%s1 + $0x78] sm:$0xff]
    %v47 = vld [vmem:[%s1 + $0x80] sm:$0xff]
    %v48 = vld [vmem:[%s1 + $0x88] sm:$0xff]
    %v49 = vld [vmem:[%s1 + $0x90] sm:$0xff]
    %v50 = vld [vmem:[%s1 + $0x98] sm:$0xff]
    %v51 = vld [vmem:[%s1 + $0xa0] sm:$0xff]
    %v52 = vld [vmem:[%s1 + $0xa8] sm:$0xff]
    %v53 = vld [vmem:[%s1 + $0xb0] sm:$0xff]
    %v54 = vld [vmem:[%s1 + $0xb8] sm:$0xff]
    %v55 = vld [vmem:[%s1 + $0xc0] sm:$0xff]
    %v56 = vld [vmem:[%s1 + $0xc8] sm:$0xff]
    %v57 = vld [vmem:[%s1 + $0xd0] sm:$0xff]
    %v58 = vld [vmem:[%s1 + $0xd8] sm:$0xff]
    %v59 = vld [vmem:[%s1 + $0xe0] sm:$0xff]
    %v60 = vld [vmem:[%s1 + $0xe8] sm:$0xff]
    %v61 = vld [vmem:[%s1 + $0xf0] sm:$0xff]
    %v62 = vld [vmem:[%s1 + $0xf8] sm:$0xff]
    %v63 = vld [vmem:[%s3] sm:$0xff]
    %v64 = vld [vmem:[%s3 + $0x8] sm:$0xff]
    %v65 = vld [vmem:[%s3 + $0x10] sm:$0xff]
    %v66 = vld [vmem:[%s3 + $0x18] sm:$0xff]
    %v67 = vld [vmem:[%s4] sm:$0x1]
    %v69 = vlaneseq
    %v70 = vshrl.u32 %v69, 7
    %v71 = vsub.s32 0, %v70
    %v72 = vrot.slane %v67, %v71
    %vm74 = vcmask 261120
    %v76 = vsel %vm74, %v31, 0
    %v79 = vsel %vm74, %v32, 0
    %v82 = vsel %vm74, %v33, 0
    %v85 = vsel %vm74, %v34, 0
    %v88 = vsel %vm74, %v35, 0
    %v91 = vsel %vm74, %v36, 0
    %v94 = vsel %vm74, %v37, 0
    %v97 = vsel %vm74, %v38, 0
    %v100 = vsel %vm74, %v39, 0
    %v103 = vsel %vm74, %v40, 0
    %v106 = vsel %vm74, %v41, 0
    %v109 = vsel %vm74, %v42, 0
    %v112 = vsel %vm74, %v43, 0
    %v115 = vsel %vm74, %v44, 0
    %v118 = vsel %vm74, %v45, 0
    %v121 = vsel %vm74, %v46, 0
    %v124 = vsel %vm74, %v47, 0
    %v127 = vsel %vm74, %v48, 0
    %v130 = vsel %vm74, %v49, 0
    %v133 = vsel %vm74, %v50, 0
    %v136 = vsel %vm74, %v51, 0
    %v139 = vsel %vm74, %v52, 0
    %v142 = vsel %vm74, %v53, 0
    %v145 = vsel %vm74, %v54, 0
    %v148 = vsel %vm74, %v55, 0
    %v151 = vsel %vm74, %v56, 0
    %v154 = vsel %vm74, %v57, 0
    %v157 = vsel %vm74, %v58, 0
    %v160 = vsel %vm74, %v59, 0
    %v163 = vsel %vm74, %v60, 0
    %v166 = vsel %vm74, %v61, 0
    %v169 = vsel %vm74, %v62, 0
    %171 = vmatprep.subr.mxu0 0.0
    %172 = vmatpush1.msra.mxu0 %v63
    %173 = vmatprep.subr.mxu0 0.0
    %174 = vmatpush1.msra.mxu0 %v64
    %175 = vmatprep.subr.mxu0 0.0
    %176 = vmatpush1.msra.mxu0 %v65
    %177 = vmatprep.subr.mxu0 0.0
    %178 = vmatpush1.msra.mxu0 %v66
    %179 = vmatprep.subr.mxu0 0.0
    %180 = vmatpush1.msra.mxu0 0.0
    %181 = vmatprep.subr.mxu0 0.0
    %182 = vmatpush1.msra.mxu0 0.0
    %183 = vmatprep.subr.mxu0 0.0
    %184 = vmatpush1.msra.mxu0 0.0
    %185 = vmatprep.subr.mxu0 0.0
    %186 = vmatpush1.msra.mxu0 0.0
    %187 = vmatprep.subr.mxu0 0.0
    %188 = vmatpush1.msra.mxu0 0.0
    %189 = vmatprep.subr.mxu0 0.0
    %190 = vmatpush1.msra.mxu0 0.0
    %191 = vmatprep.subr.mxu0 0.0
    %192 = vmatpush1.msra.mxu0 0.0
    %193 = vmatprep.subr.mxu0 0.0
    %194 = vmatpush1.msra.mxu0 0.0
    %195 = vmatprep.subr.mxu0 0.0
    %196 = vmatpush1.msra.mxu0 0.0
    %197 = vmatprep.subr.mxu0 0.0
    %198 = vmatpush1.msra.mxu0 0.0
    %199 = vmatprep.subr.mxu0 0.0
    %200 = vmatpush1.msra.mxu0 0.0
    %201 = vmatprep.subr.mxu0 0.0
    %202 = vmatpush1.msra.mxu0 0.0
    %203 = vmatprep.subr.mxu0 0.0
    %204 = vmatpush1.msra.mxu0 0.0
    %205 = vmatprep.subr.mxu0 0.0
    %206 = vmatpush1.msra.mxu0 0.0
    %207 = vmatprep.subr.mxu0 0.0
    %208 = vmatpush1.msra.mxu0 0.0
    %209 = vmatprep.subr.mxu0 0.0
    %210 = vmatpush1.msra.mxu0 0.0
    %211 = vmatprep.subr.mxu0 0.0
    %212 = vmatpush1.msra.mxu0 0.0
    %213 = vmatprep.subr.mxu0 0.0
    %214 = vmatpush1.msra.mxu0 0.0
    %215 = vmatprep.subr.mxu0 0.0
    %216 = vmatpush1.msra.mxu0 0.0
    %217 = vmatprep.subr.mxu0 0.0
    %218 = vmatpush1.msra.mxu0 0.0
    %219 = vmatprep.subr.mxu0 0.0
    %220 = vmatpush1.msra.mxu0 0.0
    %221 = vmatprep.subr.mxu0 0.0
    %222 = vmatpush1.msra.mxu0 0.0
    %223 = vmatprep.subr.mxu0 0.0
    %224 = vmatpush1.msra.mxu0 0.0
    %225 = vmatprep.subr.mxu0 0.0
    %226 = vmatpush1.msra.mxu0 0.0
    %227 = vmatprep.subr.mxu0 0.0
    %228 = vmatpush1.msra.mxu0 0.0
    %229 = vmatprep.subr.mxu0 0.0
    %230 = vmatpush1.msra.mxu0 0.0
    %231 = vmatprep.subr.mxu0 0.0
    %232 = vmatpush1.msra.mxu0 0.0
    %233 = vmatprep.subr.mxu0 0.0
    %234 = vmatpush1.msra.mxu0 0.0
    %235 = vmatprep.mubr.f32.mxu0 0.0
    %236 = vmatmul.mubr.f32.gmra.mrb[0].mxu0 %v76
    %v237 = vpop.f32.mrb[0].mxu0
    %v238 = vadd.f32 %v72, %v237
    %v239 = vpop.f32.mrb[0].mxu0
    %240 = vmatprep.mubr.f32.mxu0 0.0
    %241 = vmatmul.mubr.f32.gmra.mrb[0].mxu0 %v79
    %v242 = vpop.f32.mrb[0].mxu0
    %v243 = vadd.f32 %v72, %v242
    %v244 = vpop.f32.mrb[0].mxu0
    %245 = vmatprep.mubr.f32.mxu0 0.0
    %246 = vmatmul.mubr.f32.gmra.mrb[0].mxu0 %v82
    %v247 = vpop.f32.mrb[0].mxu0
    %v248 = vadd.f32 %v72, %v247
    %v249 = vpop.f32.mrb[0].mxu0
    %250 = vmatprep.mubr.f32.mxu0 0.0
    %251 = vmatmul.mubr.f32.gmra.mrb[0].mxu0 %v85
    %v252 = vpop.f32.mrb[0].mxu0
    %v253 = vadd.f32 %v72, %v252
    %v254 = vpop.f32.mrb[0].mxu0
    %255 = vmatprep.mubr.f32.mxu0 0.0
    %256 = vmatmul.mubr.f32.gmra.mrb[0].mxu0 %v88
    %v257 = vpop.f32.mrb[0].mxu0
    %v258 = vadd.f32 %v72, %v257
    %v259 = vpop.f32.mrb[0].mxu0
    %260 = vmatprep.mubr.f32.mxu0 0.0
    %261 = vmatmul.mubr.f32.gmra.mrb[0].mxu0 %v91
    %v262 = vpop.f32.mrb[0].mxu0
    %v263 = vadd.f32 %v72, %v262
    %v264 = vpop.f32.mrb[0].mxu0
    %265 = vmatprep.mubr.f32.mxu0 0.0
    %266 = vmatmul.mubr.f32.gmra.mrb[0].mxu0 %v94
    %v267 = vpop.f32.mrb[0].mxu0
    %v268 = vadd.f32 %v72, %v267
    %v269 = vpop.f32.mrb[0].mxu0
    %270 = vmatprep.mubr.f32.mxu0 0.0
    %271 = vmatmul.mubr.f32.gmra.mrb[0].mxu0 %v97
    %v272 = vpop.f32.mrb[0].mxu0
    %v273 = vadd.f32 %v72, %v272
    %v274 = vpop.f32.mrb[0].mxu0
    %275 = vmatprep.mubr.f32.mxu0 0.0
    %276 = vmatmul.mubr.f32.gmra.mrb[0].mxu0 %v100
    %v277 = vpop.f32.mrb[0].mxu0
    %v278 = vadd.f32 %v72, %v277
    %v279 = vpop.f32.mrb[0].mxu0
    %280 = vmatprep.mubr.f32.mxu0 0.0
    %281 = vmatmul.mubr.f32.gmra.mrb[0].mxu0 %v103
    %v282 = vpop.f32.mrb[0].mxu0
    %v283 = vadd.f32 %v72, %v282
    %v284 = vpop.f32.mrb[0].mxu0
    %285 = vmatprep.mubr.f32.mxu0 0.0
    %286 = vmatmul.mubr.f32.gmra.mrb[0].mxu0 %v106
    %v287 = vpop.f32.mrb[0].mxu0
    %v288 = vadd.f32 %v72, %v287
    %v289 = vpop.f32.mrb[0].mxu0
    %290 = vmatprep.mubr.f32.mxu0 0.0
    %291 = vmatmul.mubr.f32.gmra.mrb[0].mxu0 %v109
    %v292 = vpop.f32.mrb[0].mxu0
    %v293 = vadd.f32 %v72, %v292
    %v294 = vpop.f32.mrb[0].mxu0
    %295 = vmatprep.mubr.f32.mxu0 0.0
    %296 = vmatmul.mubr.f32.gmra.mrb[0].mxu0 %v112
    %v297 = vpop.f32.mrb[0].mxu0
    %v298 = vadd.f32 %v72, %v297
    %v299 = vpop.f32.mrb[0].mxu0
    %300 = vmatprep.mubr.f32.mxu0 0.0
    %301 = vmatmul.mubr.f32.gmra.mrb[0].mxu0 %v115
    %v302 = vpop.f32.mrb[0].mxu0
    %v303 = vadd.f32 %v72, %v302
    %v304 = vpop.f32.mrb[0].mxu0
    %305 = vmatprep.mubr.f32.mxu0 0.0
    %306 = vmatmul.mubr.f32.gmra.mrb[0].mxu0 %v118
    %v307 = vpop.f32.mrb[0].mxu0
    %v308 = vadd.f32 %v72, %v307
    %v309 = vpop.f32.mrb[0].mxu0
    %310 = vmatprep.mubr.f32.mxu0 0.0
    %311 = vmatmul.mubr.f32.gmra.mrb[0].mxu0 %v121
    %v312 = vpop.f32.mrb[0].mxu0
    %v313 = vadd.f32 %v72, %v312
    %v314 = vpop.f32.mrb[0].mxu0
    %315 = vmatprep.mubr.f32.mxu0 0.0
    %316 = vmatmul.mubr.f32.gmra.mrb[0].mxu0 %v124
    %v317 = vpop.f32.mrb[0].mxu0
    %v318 = vadd.f32 %v72, %v317
    %v319 = vpop.f32.mrb[0].mxu0
    %320 = vmatprep.mubr.f32.mxu0 0.0
    %321 = vmatmul.mubr.f32.gmra.mrb[0].mxu0 %v127
    %v322 = vpop.f32.mrb[0].mxu0
    %v323 = vadd.f32 %v72, %v322
    %v324 = vpop.f32.mrb[0].mxu0
    %325 = vmatprep.mubr.f32.mxu0 0.0
    %326 = vmatmul.mubr.f32.gmra.mrb[0].mxu0 %v130
    %v327 = vpop.f32.mrb[0].mxu0
    %v328 = vadd.f32 %v72, %v327
    %v329 = vpop.f32.mrb[0].mxu0
    %330 = vmatprep.mubr.f32.mxu0 0.0
    %331 = vmatmul.mubr.f32.gmra.mrb[0].mxu0 %v133
    %v332 = vpop.f32.mrb[0].mxu0
    %v333 = vadd.f32 %v72, %v332
    %v334 = vpop.f32.mrb[0].mxu0
    %335 = vmatprep.mubr.f32.mxu0 0.0
    %336 = vmatmul.mubr.f32.gmra.mrb[0].mxu0 %v136
    %v337 = vpop.f32.mrb[0].mxu0
    %v338 = vadd.f32 %v72, %v337
    %v339 = vpop.f32.mrb[0].mxu0
    %340 = vmatprep.mubr.f32.mxu0 0.0
    %341 = vmatmul.mubr.f32.gmra.mrb[0].mxu0 %v139
    %v342 = vpop.f32.mrb[0].mxu0
    %v343 = vadd.f32 %v72, %v342
    %v344 = vpop.f32.mrb[0].mxu0
    %345 = vmatprep.mubr.f32.mxu0 0.0
    %346 = vmatmul.mubr.f32.gmra.mrb[0].mxu0 %v142
    %v347 = vpop.f32.mrb[0].mxu0
    %v348 = vadd.f32 %v72, %v347
    %v349 = vpop.f32.mrb[0].mxu0
    %350 = vmatprep.mubr.f32.mxu0 0.0
    %351 = vmatmul.mubr.f32.gmra.mrb[0].mxu0 %v145
    %v352 = vpop.f32.mrb[0].mxu0
    %v353 = vadd.f32 %v72, %v352
    %v354 = vpop.f32.mrb[0].mxu0
    %355 = vmatprep.mubr.f32.mxu0 0.0
    %356 = vmatmul.mubr.f32.gmra.mrb[0].mxu0 %v148
    %v357 = vpop.f32.mrb[0].mxu0
    %v358 = vadd.f32 %v72, %v357
    %v359 = vpop.f32.mrb[0].mxu0
    %360 = vmatprep.mubr.f32.mxu0 0.0
    %361 = vmatmul.mubr.f32.gmra.mrb[0].mxu0 %v151
    %v362 = vpop.f32.mrb[0].mxu0
    %v363 = vadd.f32 %v72, %v362
    %v364 = vpop.f32.mrb[0].mxu0
    %365 = vmatprep.mubr.f32.mxu0 0.0
    %366 = vmatmul.mubr.f32.gmra.mrb[0].mxu0 %v154
    %v367 = vpop.f32.mrb[0].mxu0
    %v368 = vadd.f32 %v72, %v367
    %v369 = vpop.f32.mrb[0].mxu0
    %370 = vmatprep.mubr.f32.mxu0 0.0
    %371 = vmatmul.mubr.f32.gmra.mrb[0].mxu0 %v157
    %v372 = vpop.f32.mrb[0].mxu0
    %v373 = vadd.f32 %v72, %v372
    %v374 = vpop.f32.mrb[0].mxu0
    %375 = vmatprep.mubr.f32.mxu0 0.0
    %376 = vmatmul.mubr.f32.gmra.mrb[0].mxu0 %v160
    %v377 = vpop.f32.mrb[0].mxu0
    %v378 = vadd.f32 %v72, %v377
    %v379 = vpop.f32.mrb[0].mxu0
    %380 = vmatprep.mubr.f32.mxu0 0.0
    %381 = vmatmul.mubr.f32.gmra.mrb[0].mxu0 %v163
    %v382 = vpop.f32.mrb[0].mxu0
    %v383 = vadd.f32 %v72, %v382
    %v384 = vpop.f32.mrb[0].mxu0
    %385 = vmatprep.mubr.f32.mxu0 0.0
    %386 = vmatmul.mubr.f32.gmra.mrb[0].mxu0 %v166
    %v387 = vpop.f32.mrb[0].mxu0
    %v388 = vadd.f32 %v72, %v387
    %v389 = vpop.f32.mrb[0].mxu0
    %390 = vmatprep.mubr.f32.mxu0 0.0
    %391 = vmatmul.mubr.f32.gmra.mrb[0].mxu0 %v169
    %v392 = vpop.f32.mrb[0].mxu0
    %v393 = vadd.f32 %v72, %v392
    %v394 = vpop.f32.mrb[0].mxu0
    %395 = vdwg.mxu0
    %v396 = vld [vmem:[%s2] sm:$0xff]
    %v397 = vld [vmem:[%s2 + $0x8] sm:$0xff]
    %v398 = vld [vmem:[%s2 + $0x10] sm:$0xff]
    %v399 = vld [vmem:[%s2 + $0x18] sm:$0xff]
    %v400 = vld [vmem:[%s2 + $0x20] sm:$0xff]
    %v401 = vld [vmem:[%s2 + $0x28] sm:$0xff]
    %v402 = vld [vmem:[%s2 + $0x30] sm:$0xff]
    %v403 = vld [vmem:[%s2 + $0x38] sm:$0xff]
    %v404 = vld [vmem:[%s2 + $0x40] sm:$0xff]
    %v405 = vld [vmem:[%s2 + $0x48] sm:$0xff]
    %v406 = vld [vmem:[%s2 + $0x50] sm:$0xff]
    %v407 = vld [vmem:[%s2 + $0x58] sm:$0xff]
    %v408 = vld [vmem:[%s2 + $0x60] sm:$0xff]
    %v409 = vld [vmem:[%s2 + $0x68] sm:$0xff]
    %v410 = vld [vmem:[%s2 + $0x70] sm:$0xff]
    %v411 = vld [vmem:[%s2 + $0x78] sm:$0xff]
    %v412 = vld [vmem:[%s2 + $0x80] sm:$0xff]
    %v413 = vld [vmem:[%s2 + $0x88] sm:$0xff]
    %v414 = vld [vmem:[%s2 + $0x90] sm:$0xff]
    %v415 = vld [vmem:[%s2 + $0x98] sm:$0xff]
    %v416 = vld [vmem:[%s2 + $0xa0] sm:$0xff]
    %v417 = vld [vmem:[%s2 + $0xa8] sm:$0xff]
    %v418 = vld [vmem:[%s2 + $0xb0] sm:$0xff]
    %v419 = vld [vmem:[%s2 + $0xb8] sm:$0xff]
    %v420 = vld [vmem:[%s2 + $0xc0] sm:$0xff]
    %v421 = vld [vmem:[%s2 + $0xc8] sm:$0xff]
    %v422 = vld [vmem:[%s2 + $0xd0] sm:$0xff]
    %v423 = vld [vmem:[%s2 + $0xd8] sm:$0xff]
    %v424 = vld [vmem:[%s2 + $0xe0] sm:$0xff]
    %v425 = vld [vmem:[%s2 + $0xe8] sm:$0xff]
    %v426 = vld [vmem:[%s2 + $0xf0] sm:$0xff]
    %v427 = vld [vmem:[%s2 + $0xf8] sm:$0xff]
    %v428 = vld [vmem:[%s5] sm:$0xff]
    %v429 = vld [vmem:[%s5 + $0x8] sm:$0xff]
    %v430 = vld [vmem:[%s5 + $0x10] sm:$0xff]
    %v431 = vld [vmem:[%s5 + $0x18] sm:$0xff]
    %v432 = vld [vmem:[%s6] sm:$0x1]
    %v434 = vlaneseq
    %v435 = vshrl.u32 %v434, 7
    %v436 = vsub.s32 0, %v435
    %v437 = vrot.slane %v432, %v436
    %v440 = vsel %vm74, %v396, 0
    %v443 = vsel %vm74, %v397, 0
    %v446 = vsel %vm74, %v398, 0
    %v449 = vsel %vm74, %v399, 0
    %v452 = vsel %vm74, %v400, 0
    %v455 = vsel %vm74, %v401, 0
    %v458 = vsel %vm74, %v402, 0
    %v461 = vsel %vm74, %v403, 0
    %v464 = vsel %vm74, %v404, 0
    %v467 = vsel %vm74, %v405, 0
    %v470 = vsel %vm74, %v406, 0
    %v473 = vsel %vm74, %v407, 0
    %v476 = vsel %vm74, %v408, 0
    %v479 = vsel %vm74, %v409, 0
    %v482 = vsel %vm74, %v410, 0
    %v485 = vsel %vm74, %v411, 0
    %v488 = vsel %vm74, %v412, 0
    %v491 = vsel %vm74, %v413, 0
    %v494 = vsel %vm74, %v414, 0
    %v497 = vsel %vm74, %v415, 0
    %v500 = vsel %vm74, %v416, 0
    %v503 = vsel %vm74, %v417, 0
    %v506 = vsel %vm74, %v418, 0
    %v509 = vsel %vm74, %v419, 0
    %v512 = vsel %vm74, %v420, 0
    %v515 = vsel %vm74, %v421, 0
    %v518 = vsel %vm74, %v422, 0
    %v521 = vsel %vm74, %v423, 0
    %v524 = vsel %vm74, %v424, 0
    %v527 = vsel %vm74, %v425, 0
    %v530 = vsel %vm74, %v426, 0
    %v533 = vsel %vm74, %v427, 0
    %535 = vmatprep.subr.mxu0 0.0
    %536 = vmatpush1.msra.mxu0 %v428
    %537 = vmatprep.subr.mxu0 0.0
    %538 = vmatpush1.msra.mxu0 %v429
    %539 = vmatprep.subr.mxu0 0.0
    %540 = vmatpush1.msra.mxu0 %v430
    %541 = vmatprep.subr.mxu0 0.0
    %542 = vmatpush1.msra.mxu0 %v431
    %543 = vmatprep.subr.mxu0 0.0
    %544 = vmatpush1.msra.mxu0 0.0
    %545 = vmatprep.subr.mxu0 0.0
    %546 = vmatpush1.msra.mxu0 0.0
    %547 = vmatprep.subr.mxu0 0.0
    %548 = vmatpush1.msra.mxu0 0.0
    %549 = vmatprep.subr.mxu0 0.0
    %550 = vmatpush1.msra.mxu0 0.0
    %551 = vmatprep.subr.mxu0 0.0
    %552 = vmatpush1.msra.mxu0 0.0
    %553 = vmatprep.subr.mxu0 0.0
    %554 = vmatpush1.msra.mxu0 0.0
    %555 = vmatprep.subr.mxu0 0.0
    %556 = vmatpush1.msra.mxu0 0.0
    %557 = vmatprep.subr.mxu0 0.0
    %558 = vmatpush1.msra.mxu0 0.0
    %559 = vmatprep.subr.mxu0 0.0
    %560 = vmatpush1.msra.mxu0 0.0
    %561 = vmatprep.subr.mxu0 0.0
    %562 = vmatpush1.msra.mxu0 0.0
    %563 = vmatprep.subr.mxu0 0.0
    %564 = vmatpush1.msra.mxu0 0.0
    %565 = vmatprep.subr.mxu0 0.0
    %566 = vmatpush1.msra.mxu0 0.0
    %567 = vmatprep.subr.mxu0 0.0
    %568 = vmatpush1.msra.mxu0 0.0
    %569 = vmatprep.subr.mxu0 0.0
    %570 = vmatpush1.msra.mxu0 0.0
    %571 = vmatprep.subr.mxu0 0.0
    %572 = vmatpush1.msra.mxu0 0.0
    %573 = vmatprep.subr.mxu0 0.0
    %574 = vmatpush1.msra.mxu0 0.0
    %575 = vmatprep.subr.mxu0 0.0
    %576 = vmatpush1.msra.mxu0 0.0
    %577 = vmatprep.subr.mxu0 0.0
    %578 = vmatpush1.msra.mxu0 0.0
    %579 = vmatprep.subr.mxu0 0.0
    %580 = vmatpush1.msra.mxu0 0.0
    %581 = vmatprep.subr.mxu0 0.0
    %582 = vmatpush1.msra.mxu0 0.0
    %583 = vmatprep.subr.mxu0 0.0
    %584 = vmatpush1.msra.mxu0 0.0
    %585 = vmatprep.subr.mxu0 0.0
    %586 = vmatpush1.msra.mxu0 0.0
    %587 = vmatprep.subr.mxu0 0.0
    %588 = vmatpush1.msra.mxu0 0.0
    %589 = vmatprep.subr.mxu0 0.0
    %590 = vmatpush1.msra.mxu0 0.0
    %591 = vmatprep.subr.mxu0 0.0
    %592 = vmatpush1.msra.mxu0 0.0
    %593 = vmatprep.subr.mxu0 0.0
    %594 = vmatpush1.msra.mxu0 0.0
    %595 = vmatprep.subr.mxu0 0.0
    %596 = vmatpush1.msra.mxu0 0.0
    %597 = vmatprep.subr.mxu0 0.0
    %598 = vmatpush1.msra.mxu0 0.0
    %599 = vmatprep.mubr.f32.mxu0 0.0
    %600 = vmatmul.mubr.f32.gmra.mrb[0].mxu0 %v440
    %v601 = vpop.f32.mrb[0].mxu0
    %v602 = vadd.f32 %v437, %v601
    %v603 = vpop.f32.mrb[0].mxu0
    %604 = vmatprep.mubr.f32.mxu0 0.0
    %605 = vmatmul.mubr.f32.gmra.mrb[0].mxu0 %v443
    %v606 = vpop.f32.mrb[0].mxu0
    %v607 = vadd.f32 %v437, %v606
    %v608 = vpop.f32.mrb[0].mxu0
    %609 = vmatprep.mubr.f32.mxu0 0.0
    %610 = vmatmul.mubr.f32.gmra.mrb[0].mxu0 %v446
    %v611 = vpop.f32.mrb[0].mxu0
    %v612 = vadd.f32 %v437, %v611
    %v613 = vpop.f32.mrb[0].mxu0
    %614 = vmatprep.mubr.f32.mxu0 0.0
    %615 = vmatmul.mubr.f32.gmra.mrb[0].mxu0 %v449
    %v616 = vpop.f32.mrb[0].mxu0
    %v617 = vadd.f32 %v437, %v616
    %v618 = vpop.f32.mrb[0].mxu0
    %619 = vmatprep.mubr.f32.mxu0 0.0
    %620 = vmatmul.mubr.f32.gmra.mrb[0].mxu0 %v452
    %v621 = vpop.f32.mrb[0].mxu0
    %v622 = vadd.f32 %v437, %v621
    %v623 = vpop.f32.mrb[0].mxu0
    %624 = vmatprep.mubr.f32.mxu0 0.0
    %625 = vmatmul.mubr.f32.gmra.mrb[0].mxu0 %v455
    %v626 = vpop.f32.mrb[0].mxu0
    %v627 = vadd.f32 %v437, %v626
    %v628 = vpop.f32.mrb[0].mxu0
    %629 = vmatprep.mubr.f32.mxu0 0.0
    %630 = vmatmul.mubr.f32.gmra.mrb[0].mxu0 %v458
    %v631 = vpop.f32.mrb[0].mxu0
    %v632 = vadd.f32 %v437, %v631
    %v633 = vpop.f32.mrb[0].mxu0
    %634 = vmatprep.mubr.f32.mxu0 0.0
    %635 = vmatmul.mubr.f32.gmra.mrb[0].mxu0 %v461
    %v636 = vpop.f32.mrb[0].mxu0
    %v637 = vadd.f32 %v437, %v636
    %v638 = vpop.f32.mrb[0].mxu0
    %639 = vmatprep.mubr.f32.mxu0 0.0
    %640 = vmatmul.mubr.f32.gmra.mrb[0].mxu0 %v464
    %v641 = vpop.f32.mrb[0].mxu0
    %v642 = vadd.f32 %v437, %v641
    %v643 = vpop.f32.mrb[0].mxu0
    %644 = vmatprep.mubr.f32.mxu0 0.0
    %645 = vmatmul.mubr.f32.gmra.mrb[0].mxu0 %v467
    %v646 = vpop.f32.mrb[0].mxu0
    %v647 = vadd.f32 %v437, %v646
    %v648 = vpop.f32.mrb[0].mxu0
    %649 = vmatprep.mubr.f32.mxu0 0.0
    %650 = vmatmul.mubr.f32.gmra.mrb[0].mxu0 %v470
    %v651 = vpop.f32.mrb[0].mxu0
    %v652 = vadd.f32 %v437, %v651
    %v653 = vpop.f32.mrb[0].mxu0
    %654 = vmatprep.mubr.f32.mxu0 0.0
    %655 = vmatmul.mubr.f32.gmra.mrb[0].mxu0 %v473
    %v656 = vpop.f32.mrb[0].mxu0
    %v657 = vadd.f32 %v437, %v656
    %v658 = vpop.f32.mrb[0].mxu0
    %659 = vmatprep.mubr.f32.mxu0 0.0
    %660 = vmatmul.mubr.f32.gmra.mrb[0].mxu0 %v476
    %v661 = vpop.f32.mrb[0].mxu0
    %v662 = vadd.f32 %v437, %v661
    %v663 = vpop.f32.mrb[0].mxu0
    %664 = vmatprep.mubr.f32.mxu0 0.0
    %665 = vmatmul.mubr.f32.gmra.mrb[0].mxu0 %v479
    %v666 = vpop.f32.mrb[0].mxu0
    %v667 = vadd.f32 %v437, %v666
    %v668 = vpop.f32.mrb[0].mxu0
    %669 = vmatprep.mubr.f32.mxu0 0.0
    %670 = vmatmul.mubr.f32.gmra.mrb[0].mxu0 %v482
    %v671 = vpop.f32.mrb[0].mxu0
    %v672 = vadd.f32 %v437, %v671
    %v673 = vpop.f32.mrb[0].mxu0
    %674 = vmatprep.mubr.f32.mxu0 0.0
    %675 = vmatmul.mubr.f32.gmra.mrb[0].mxu0 %v485
    %v676 = vpop.f32.mrb[0].mxu0
    %v677 = vadd.f32 %v437, %v676
    %v678 = vpop.f32.mrb[0].mxu0
    %679 = vmatprep.mubr.f32.mxu0 0.0
    %680 = vmatmul.mubr.f32.gmra.mrb[0].mxu0 %v488
    %v681 = vpop.f32.mrb[0].mxu0
    %v682 = vadd.f32 %v437, %v681
    %v683 = vpop.f32.mrb[0].mxu0
    %684 = vmatprep.mubr.f32.mxu0 0.0
    %685 = vmatmul.mubr.f32.gmra.mrb[0].mxu0 %v491
    %v686 = vpop.f32.mrb[0].mxu0
    %v687 = vadd.f32 %v437, %v686
    %v688 = vpop.f32.mrb[0].mxu0
    %689 = vmatprep.mubr.f32.mxu0 0.0
    %690 = vmatmul.mubr.f32.gmra.mrb[0].mxu0 %v494
    %v691 = vpop.f32.mrb[0].mxu0
    %v692 = vadd.f32 %v437, %v691
    %v693 = vpop.f32.mrb[0].mxu0
    %694 = vmatprep.mubr.f32.mxu0 0.0
    %695 = vmatmul.mubr.f32.gmra.mrb[0].mxu0 %v497
    %v696 = vpop.f32.mrb[0].mxu0
    %v697 = vadd.f32 %v437, %v696
    %v698 = vpop.f32.mrb[0].mxu0
    %699 = vmatprep.mubr.f32.mxu0 0.0
    %700 = vmatmul.mubr.f32.gmra.mrb[0].mxu0 %v500
    %v701 = vpop.f32.mrb[0].mxu0
    %v702 = vadd.f32 %v437, %v701
    %v703 = vpop.f32.mrb[0].mxu0
    %704 = vmatprep.mubr.f32.mxu0 0.0
    %705 = vmatmul.mubr.f32.gmra.mrb[0].mxu0 %v503
    %v706 = vpop.f32.mrb[0].mxu0
    %v707 = vadd.f32 %v437, %v706
    %v708 = vpop.f32.mrb[0].mxu0
    %709 = vmatprep.mubr.f32.mxu0 0.0
    %710 = vmatmul.mubr.f32.gmra.mrb[0].mxu0 %v506
    %v711 = vpop.f32.mrb[0].mxu0
    %v712 = vadd.f32 %v437, %v711
    %v713 = vpop.f32.mrb[0].mxu0
    %714 = vmatprep.mubr.f32.mxu0 0.0
    %715 = vmatmul.mubr.f32.gmra.mrb[0].mxu0 %v509
    %v716 = vpop.f32.mrb[0].mxu0
    %v717 = vadd.f32 %v437, %v716
    %v718 = vpop.f32.mrb[0].mxu0
    %719 = vmatprep.mubr.f32.mxu0 0.0
    %720 = vmatmul.mubr.f32.gmra.mrb[0].mxu0 %v512
    %v721 = vpop.f32.mrb[0].mxu0
    %v722 = vadd.f32 %v437, %v721
    %v723 = vpop.f32.mrb[0].mxu0
    %724 = vmatprep.mubr.f32.mxu0 0.0
    %725 = vmatmul.mubr.f32.gmra.mrb[0].mxu0 %v515
    %v726 = vpop.f32.mrb[0].mxu0
    %v727 = vadd.f32 %v437, %v726
    %v728 = vpop.f32.mrb[0].mxu0
    %729 = vmatprep.mubr.f32.mxu0 0.0
    %730 = vmatmul.mubr.f32.gmra.mrb[0].mxu0 %v518
    %v731 = vpop.f32.mrb[0].mxu0
    %v732 = vadd.f32 %v437, %v731
    %v733 = vpop.f32.mrb[0].mxu0
    %734 = vmatprep.mubr.f32.mxu0 0.0
    %735 = vmatmul.mubr.f32.gmra.mrb[0].mxu0 %v521
    %v736 = vpop.f32.mrb[0].mxu0
    %v737 = vadd.f32 %v437, %v736
    %v738 = vpop.f32.mrb[0].mxu0
    %739 = vmatprep.mubr.f32.mxu0 0.0
    %740 = vmatmul.mubr.f32.gmra.mrb[0].mxu0 %v524
    %v741 = vpop.f32.mrb[0].mxu0
    %v742 = vadd.f32 %v437, %v741
    %v743 = vpop.f32.mrb[0].mxu0
    %744 = vmatprep.mubr.f32.mxu0 0.0
    %745 = vmatmul.mubr.f32.gmra.mrb[0].mxu0 %v527
    %v746 = vpop.f32.mrb[0].mxu0
    %v747 = vadd.f32 %v437, %v746
    %v748 = vpop.f32.mrb[0].mxu0
    %749 = vmatprep.mubr.f32.mxu0 0.0
    %750 = vmatmul.mubr.f32.gmra.mrb[0].mxu0 %v530
    %v751 = vpop.f32.mrb[0].mxu0
    %v752 = vadd.f32 %v437, %v751
    %v753 = vpop.f32.mrb[0].mxu0
    %754 = vmatprep.mubr.f32.mxu0 0.0
    %755 = vmatmul.mubr.f32.gmra.mrb[0].mxu0 %v533
    %v756 = vpop.f32.mrb[0].mxu0
    %v757 = vadd.f32 %v437, %v756
    %v758 = vpop.f32.mrb[0].mxu0
    %759 = vdwg.mxu0
    %v760 = vmul.f32 %v238, %v238
    %v761 = vmul.f32 %v243, %v243
    %v762 = vmul.f32 %v248, %v248
    %v763 = vmul.f32 %v253, %v253
    %v764 = vmul.f32 %v258, %v258
    %v765 = vmul.f32 %v263, %v263
    %v766 = vmul.f32 %v268, %v268
    %v767 = vmul.f32 %v273, %v273
    %v768 = vmul.f32 %v278, %v278
    %v769 = vmul.f32 %v283, %v283
    %v770 = vmul.f32 %v288, %v288
    %v771 = vmul.f32 %v293, %v293
    %v772 = vmul.f32 %v298, %v298
    %v773 = vmul.f32 %v303, %v303
    %v774 = vmul.f32 %v308, %v308
    %v775 = vmul.f32 %v313, %v313
    %v776 = vmul.f32 %v318, %v318
    %v777 = vmul.f32 %v323, %v323
    %v778 = vmul.f32 %v328, %v328
    %v779 = vmul.f32 %v333, %v333
    %v780 = vmul.f32 %v338, %v338
    %v781 = vmul.f32 %v343, %v343
    %v782 = vmul.f32 %v348, %v348
    %v783 = vmul.f32 %v353, %v353
    %v784 = vmul.f32 %v358, %v358
    %v785 = vmul.f32 %v363, %v363
    %v786 = vmul.f32 %v368, %v368
    %v787 = vmul.f32 %v373, %v373
    %v788 = vmul.f32 %v378, %v378
    %v789 = vmul.f32 %v383, %v383
    %v790 = vmul.f32 %v388, %v388
    %v791 = vmul.f32 %v393, %v393
    %792 = vadd.xlane.f32.xlu0 %v760
    %v793 = vpop.xlane.xlu0 %792
    %794 = vadd.xlane.f32.xlu0 %v761
    %v795 = vpop.xlane.xlu0 %794
    %796 = vadd.xlane.f32.xlu0 %v762
    %v797 = vpop.xlane.xlu0 %796
    %798 = vadd.xlane.f32.xlu0 %v763
    %v799 = vpop.xlane.xlu0 %798
    %800 = vadd.xlane.f32.xlu0 %v764
    %v801 = vpop.xlane.xlu0 %800
    %802 = vadd.xlane.f32.xlu0 %v765
    %v803 = vpop.xlane.xlu0 %802
    %804 = vadd.xlane.f32.xlu0 %v766
    %v805 = vpop.xlane.xlu0 %804
    %806 = vadd.xlane.f32.xlu0 %v767
    %v807 = vpop.xlane.xlu0 %806
    %808 = vadd.xlane.f32.xlu0 %v768
    %v809 = vpop.xlane.xlu0 %808
    %810 = vadd.xlane.f32.xlu0 %v769
    %v811 = vpop.xlane.xlu0 %810
    %812 = vadd.xlane.f32.xlu0 %v770
    %v813 = vpop.xlane.xlu0 %812
    %814 = vadd.xlane.f32.xlu0 %v771
    %v815 = vpop.xlane.xlu0 %814
    %816 = vadd.xlane.f32.xlu0 %v772
    %v817 = vpop.xlane.xlu0 %816
    %818 = vadd.xlane.f32.xlu0 %v773
    %v819 = vpop.xlane.xlu0 %818
    %820 = vadd.xlane.f32.xlu0 %v774
    %v821 = vpop.xlane.xlu0 %820
    %822 = vadd.xlane.f32.xlu0 %v775
    %v823 = vpop.xlane.xlu0 %822
    %824 = vadd.xlane.f32.xlu0 %v776
    %v825 = vpop.xlane.xlu0 %824
    %826 = vadd.xlane.f32.xlu0 %v777
    %v827 = vpop.xlane.xlu0 %826
    %828 = vadd.xlane.f32.xlu0 %v778
    %v829 = vpop.xlane.xlu0 %828
    %830 = vadd.xlane.f32.xlu0 %v779
    %v831 = vpop.xlane.xlu0 %830
    %832 = vadd.xlane.f32.xlu0 %v780
    %v833 = vpop.xlane.xlu0 %832
    %834 = vadd.xlane.f32.xlu0 %v781
    %v835 = vpop.xlane.xlu0 %834
    %836 = vadd.xlane.f32.xlu0 %v782
    %v837 = vpop.xlane.xlu0 %836
    %838 = vadd.xlane.f32.xlu0 %v783
    %v839 = vpop.xlane.xlu0 %838
    %840 = vadd.xlane.f32.xlu0 %v784
    %v841 = vpop.xlane.xlu0 %840
    %842 = vadd.xlane.f32.xlu0 %v785
    %v843 = vpop.xlane.xlu0 %842
    %844 = vadd.xlane.f32.xlu0 %v786
    %v845 = vpop.xlane.xlu0 %844
    %846 = vadd.xlane.f32.xlu0 %v787
    %v847 = vpop.xlane.xlu0 %846
    %848 = vadd.xlane.f32.xlu0 %v788
    %v849 = vpop.xlane.xlu0 %848
    %850 = vadd.xlane.f32.xlu0 %v789
    %v851 = vpop.xlane.xlu0 %850
    %852 = vadd.xlane.f32.xlu0 %v790
    %v853 = vpop.xlane.xlu0 %852
    %854 = vadd.xlane.f32.xlu0 %v791
    %v855 = vpop.xlane.xlu0 %854
    %v856 = vmax.f32 %v793, 1e-24
    %v857 = vmax.f32 %v795, 1e-24
    %v858 = vmax.f32 %v797, 1e-24
    %v859 = vmax.f32 %v799, 1e-24
    %v860 = vmax.f32 %v801, 1e-24
    %v861 = vmax.f32 %v803, 1e-24
    %v862 = vmax.f32 %v805, 1e-24
    %v863 = vmax.f32 %v807, 1e-24
    %v864 = vmax.f32 %v809, 1e-24
    %v865 = vmax.f32 %v811, 1e-24
    %v866 = vmax.f32 %v813, 1e-24
    %v867 = vmax.f32 %v815, 1e-24
    %v868 = vmax.f32 %v817, 1e-24
    %v869 = vmax.f32 %v819, 1e-24
    %v870 = vmax.f32 %v821, 1e-24
    %v871 = vmax.f32 %v823, 1e-24
    %v872 = vmax.f32 %v825, 1e-24
    %v873 = vmax.f32 %v827, 1e-24
    %v874 = vmax.f32 %v829, 1e-24
    %v875 = vmax.f32 %v831, 1e-24
    %v876 = vmax.f32 %v833, 1e-24
    %v877 = vmax.f32 %v835, 1e-24
    %v878 = vmax.f32 %v837, 1e-24
    %v879 = vmax.f32 %v839, 1e-24
    %v880 = vmax.f32 %v841, 1e-24
    %v881 = vmax.f32 %v843, 1e-24
    %v882 = vmax.f32 %v845, 1e-24
    %v883 = vmax.f32 %v847, 1e-24
    %v884 = vmax.f32 %v849, 1e-24
    %v885 = vmax.f32 %v851, 1e-24
    %v886 = vmax.f32 %v853, 1e-24
    %v887 = vmax.f32 %v855, 1e-24
    %v888 = vrsqrt.pop %v856
    %v889 = vrsqrt.pop %v857
    %v890 = vrsqrt.pop %v858
    %v891 = vrsqrt.pop %v859
    %v892 = vrsqrt.pop %v860
    %v893 = vrsqrt.pop %v861
    %v894 = vrsqrt.pop %v862
    %v895 = vrsqrt.pop %v863
    %v896 = vrsqrt.pop %v864
    %v897 = vrsqrt.pop %v865
    %v898 = vrsqrt.pop %v866
    %v899 = vrsqrt.pop %v867
    %v900 = vrsqrt.pop %v868
    %v901 = vrsqrt.pop %v869
    %v902 = vrsqrt.pop %v870
    %v903 = vrsqrt.pop %v871
    %v904 = vrsqrt.pop %v872
    %v905 = vrsqrt.pop %v873
    %v906 = vrsqrt.pop %v874
    %v907 = vrsqrt.pop %v875
    %v908 = vrsqrt.pop %v876
    %v909 = vrsqrt.pop %v877
    %v910 = vrsqrt.pop %v878
    %v911 = vrsqrt.pop %v879
    %v912 = vrsqrt.pop %v880
    %v913 = vrsqrt.pop %v881
    %v914 = vrsqrt.pop %v882
    %v915 = vrsqrt.pop %v883
    %v916 = vrsqrt.pop %v884
    %v917 = vrsqrt.pop %v885
    %v918 = vrsqrt.pop %v886
    %v919 = vrsqrt.pop %v887
    %v920 = vmul.f32 %v238, %v888
    %v921 = vmul.f32 %v243, %v889
    %v922 = vmul.f32 %v248, %v890
    %v923 = vmul.f32 %v253, %v891
    %v924 = vmul.f32 %v258, %v892
    %v925 = vmul.f32 %v263, %v893
    %v926 = vmul.f32 %v268, %v894
    %v927 = vmul.f32 %v273, %v895
    %v928 = vmul.f32 %v278, %v896
    %v929 = vmul.f32 %v283, %v897
    %v930 = vmul.f32 %v288, %v898
    %v931 = vmul.f32 %v293, %v899
    %v932 = vmul.f32 %v298, %v900
    %v933 = vmul.f32 %v303, %v901
    %v934 = vmul.f32 %v308, %v902
    %v935 = vmul.f32 %v313, %v903
    %v936 = vmul.f32 %v318, %v904
    %v937 = vmul.f32 %v323, %v905
    %v938 = vmul.f32 %v328, %v906
    %v939 = vmul.f32 %v333, %v907
    %v940 = vmul.f32 %v338, %v908
    %v941 = vmul.f32 %v343, %v909
    %v942 = vmul.f32 %v348, %v910
    %v943 = vmul.f32 %v353, %v911
    %v944 = vmul.f32 %v358, %v912
    %v945 = vmul.f32 %v363, %v913
    %v946 = vmul.f32 %v368, %v914
    %v947 = vmul.f32 %v373, %v915
    %v948 = vmul.f32 %v378, %v916
    %v949 = vmul.f32 %v383, %v917
    %v950 = vmul.f32 %v388, %v918
    %v951 = vmul.f32 %v393, %v919
    %v952 = vmul.f32 %v602, %v602
    %v953 = vmul.f32 %v607, %v607
    %v954 = vmul.f32 %v612, %v612
    %v955 = vmul.f32 %v617, %v617
    %v956 = vmul.f32 %v622, %v622
    %v957 = vmul.f32 %v627, %v627
    %v958 = vmul.f32 %v632, %v632
    %v959 = vmul.f32 %v637, %v637
    %v960 = vmul.f32 %v642, %v642
    %v961 = vmul.f32 %v647, %v647
    %v962 = vmul.f32 %v652, %v652
    %v963 = vmul.f32 %v657, %v657
    %v964 = vmul.f32 %v662, %v662
    %v965 = vmul.f32 %v667, %v667
    %v966 = vmul.f32 %v672, %v672
    %v967 = vmul.f32 %v677, %v677
    %v968 = vmul.f32 %v682, %v682
    %v969 = vmul.f32 %v687, %v687
    %v970 = vmul.f32 %v692, %v692
    %v971 = vmul.f32 %v697, %v697
    %v972 = vmul.f32 %v702, %v702
    %v973 = vmul.f32 %v707, %v707
    %v974 = vmul.f32 %v712, %v712
    %v975 = vmul.f32 %v717, %v717
    %v976 = vmul.f32 %v722, %v722
    %v977 = vmul.f32 %v727, %v727
    %v978 = vmul.f32 %v732, %v732
    %v979 = vmul.f32 %v737, %v737
    %v980 = vmul.f32 %v742, %v742
    %v981 = vmul.f32 %v747, %v747
    %v982 = vmul.f32 %v752, %v752
    %v983 = vmul.f32 %v757, %v757
    %984 = vadd.xlane.f32.xlu0 %v952
    %v985 = vpop.xlane.xlu0 %984
    %986 = vadd.xlane.f32.xlu0 %v953
    %v987 = vpop.xlane.xlu0 %986
    %988 = vadd.xlane.f32.xlu0 %v954
    %v989 = vpop.xlane.xlu0 %988
    %990 = vadd.xlane.f32.xlu0 %v955
    %v991 = vpop.xlane.xlu0 %990
    %992 = vadd.xlane.f32.xlu0 %v956
    %v993 = vpop.xlane.xlu0 %992
    %994 = vadd.xlane.f32.xlu0 %v957
    %v995 = vpop.xlane.xlu0 %994
    %996 = vadd.xlane.f32.xlu0 %v958
    %v997 = vpop.xlane.xlu0 %996
    %998 = vadd.xlane.f32.xlu0 %v959
    %v999 = vpop.xlane.xlu0 %998
    %1000 = vadd.xlane.f32.xlu0 %v960
    %v1001 = vpop.xlane.xlu0 %1000
    %1002 = vadd.xlane.f32.xlu0 %v961
    %v1003 = vpop.xlane.xlu0 %1002
    %1004 = vadd.xlane.f32.xlu0 %v962
    %v1005 = vpop.xlane.xlu0 %1004
    %1006 = vadd.xlane.f32.xlu0 %v963
    %v1007 = vpop.xlane.xlu0 %1006
    %1008 = vadd.xlane.f32.xlu0 %v964
    %v1009 = vpop.xlane.xlu0 %1008
    %1010 = vadd.xlane.f32.xlu0 %v965
    %v1011 = vpop.xlane.xlu0 %1010
    %1012 = vadd.xlane.f32.xlu0 %v966
    %v1013 = vpop.xlane.xlu0 %1012
    %1014 = vadd.xlane.f32.xlu0 %v967
    %v1015 = vpop.xlane.xlu0 %1014
    %1016 = vadd.xlane.f32.xlu0 %v968
    %v1017 = vpop.xlane.xlu0 %1016
    %1018 = vadd.xlane.f32.xlu0 %v969
    %v1019 = vpop.xlane.xlu0 %1018
    %1020 = vadd.xlane.f32.xlu0 %v970
    %v1021 = vpop.xlane.xlu0 %1020
    %1022 = vadd.xlane.f32.xlu0 %v971
    %v1023 = vpop.xlane.xlu0 %1022
    %1024 = vadd.xlane.f32.xlu0 %v972
    %v1025 = vpop.xlane.xlu0 %1024
    %1026 = vadd.xlane.f32.xlu0 %v973
    %v1027 = vpop.xlane.xlu0 %1026
    %1028 = vadd.xlane.f32.xlu0 %v974
    %v1029 = vpop.xlane.xlu0 %1028
    %1030 = vadd.xlane.f32.xlu0 %v975
    %v1031 = vpop.xlane.xlu0 %1030
    %1032 = vadd.xlane.f32.xlu0 %v976
    %v1033 = vpop.xlane.xlu0 %1032
    %1034 = vadd.xlane.f32.xlu0 %v977
    %v1035 = vpop.xlane.xlu0 %1034
    %1036 = vadd.xlane.f32.xlu0 %v978
    %v1037 = vpop.xlane.xlu0 %1036
    %1038 = vadd.xlane.f32.xlu0 %v979
    %v1039 = vpop.xlane.xlu0 %1038
    %1040 = vadd.xlane.f32.xlu0 %v980
    %v1041 = vpop.xlane.xlu0 %1040
    %1042 = vadd.xlane.f32.xlu0 %v981
    %v1043 = vpop.xlane.xlu0 %1042
    %1044 = vadd.xlane.f32.xlu0 %v982
    %v1045 = vpop.xlane.xlu0 %1044
    %1046 = vadd.xlane.f32.xlu0 %v983
    %v1047 = vpop.xlane.xlu0 %1046
    %v1048 = vmax.f32 %v985, 1e-24
    %v1049 = vmax.f32 %v987, 1e-24
    %v1050 = vmax.f32 %v989, 1e-24
    %v1051 = vmax.f32 %v991, 1e-24
    %v1052 = vmax.f32 %v993, 1e-24
    %v1053 = vmax.f32 %v995, 1e-24
    %v1054 = vmax.f32 %v997, 1e-24
    %v1055 = vmax.f32 %v999, 1e-24
    %v1056 = vmax.f32 %v1001, 1e-24
    %v1057 = vmax.f32 %v1003, 1e-24
    %v1058 = vmax.f32 %v1005, 1e-24
    %v1059 = vmax.f32 %v1007, 1e-24
    %v1060 = vmax.f32 %v1009, 1e-24
    %v1061 = vmax.f32 %v1011, 1e-24
    %v1062 = vmax.f32 %v1013, 1e-24
    %v1063 = vmax.f32 %v1015, 1e-24
    %v1064 = vmax.f32 %v1017, 1e-24
    %v1065 = vmax.f32 %v1019, 1e-24
    %v1066 = vmax.f32 %v1021, 1e-24
    %v1067 = vmax.f32 %v1023, 1e-24
    %v1068 = vmax.f32 %v1025, 1e-24
    %v1069 = vmax.f32 %v1027, 1e-24
    %v1070 = vmax.f32 %v1029, 1e-24
    %v1071 = vmax.f32 %v1031, 1e-24
    %v1072 = vmax.f32 %v1033, 1e-24
    %v1073 = vmax.f32 %v1035, 1e-24
    %v1074 = vmax.f32 %v1037, 1e-24
    %v1075 = vmax.f32 %v1039, 1e-24
    %v1076 = vmax.f32 %v1041, 1e-24
    %v1077 = vmax.f32 %v1043, 1e-24
    %v1078 = vmax.f32 %v1045, 1e-24
    %v1079 = vmax.f32 %v1047, 1e-24
    %v1080 = vrsqrt.pop %v1048
    %v1081 = vrsqrt.pop %v1049
    %v1082 = vrsqrt.pop %v1050
    %v1083 = vrsqrt.pop %v1051
    %v1084 = vrsqrt.pop %v1052
    %v1085 = vrsqrt.pop %v1053
    %v1086 = vrsqrt.pop %v1054
    %v1087 = vrsqrt.pop %v1055
    %v1088 = vrsqrt.pop %v1056
    %v1089 = vrsqrt.pop %v1057
    %v1090 = vrsqrt.pop %v1058
    %v1091 = vrsqrt.pop %v1059
    %v1092 = vrsqrt.pop %v1060
    %v1093 = vrsqrt.pop %v1061
    %v1094 = vrsqrt.pop %v1062
    %v1095 = vrsqrt.pop %v1063
    %v1096 = vrsqrt.pop %v1064
    %v1097 = vrsqrt.pop %v1065
    %v1098 = vrsqrt.pop %v1066
    %v1099 = vrsqrt.pop %v1067
    %v1100 = vrsqrt.pop %v1068
    %v1101 = vrsqrt.pop %v1069
    %v1102 = vrsqrt.pop %v1070
    %v1103 = vrsqrt.pop %v1071
    %v1104 = vrsqrt.pop %v1072
    %v1105 = vrsqrt.pop %v1073
    %v1106 = vrsqrt.pop %v1074
    %v1107 = vrsqrt.pop %v1075
    %v1108 = vrsqrt.pop %v1076
    %v1109 = vrsqrt.pop %v1077
    %v1110 = vrsqrt.pop %v1078
    %v1111 = vrsqrt.pop %v1079
    %v1112 = vmul.f32 %v602, %v1080
    %v1113 = vmul.f32 %v607, %v1081
    %v1114 = vmul.f32 %v612, %v1082
    %v1115 = vmul.f32 %v617, %v1083
    %v1116 = vmul.f32 %v622, %v1084
    %v1117 = vmul.f32 %v627, %v1085
    %v1118 = vmul.f32 %v632, %v1086
    %v1119 = vmul.f32 %v637, %v1087
    %v1120 = vmul.f32 %v642, %v1088
    %v1121 = vmul.f32 %v647, %v1089
    %v1122 = vmul.f32 %v652, %v1090
    %v1123 = vmul.f32 %v657, %v1091
    %v1124 = vmul.f32 %v662, %v1092
    %v1125 = vmul.f32 %v667, %v1093
    %v1126 = vmul.f32 %v672, %v1094
    %v1127 = vmul.f32 %v677, %v1095
    %v1128 = vmul.f32 %v682, %v1096
    %v1129 = vmul.f32 %v687, %v1097
    %v1130 = vmul.f32 %v692, %v1098
    %v1131 = vmul.f32 %v697, %v1099
    %v1132 = vmul.f32 %v702, %v1100
    %v1133 = vmul.f32 %v707, %v1101
    %v1134 = vmul.f32 %v712, %v1102
    %v1135 = vmul.f32 %v717, %v1103
    %v1136 = vmul.f32 %v722, %v1104
    %v1137 = vmul.f32 %v727, %v1105
    %v1138 = vmul.f32 %v732, %v1106
    %v1139 = vmul.f32 %v737, %v1107
    %v1140 = vmul.f32 %v742, %v1108
    %v1141 = vmul.f32 %v747, %v1109
    %v1142 = vmul.f32 %v752, %v1110
    %v1143 = vmul.f32 %v757, %v1111
    %s1144 = sld [smem:[#allocation2]]
    %v1145 = vstv %s1144
    %v1146 = vmul.f32 %v1145, 1.442695
    %v1147 = vpow.pop %v1146
    %s1148 = vtos %v1147
    %v1149 = vstv %s1148
    %v1150 = vmul.f32 %v920, %v1149
    %v1151 = vmul.f32 %v921, %v1149
    %v1152 = vmul.f32 %v922, %v1149
    %v1153 = vmul.f32 %v923, %v1149
    %v1154 = vmul.f32 %v924, %v1149
    %v1155 = vmul.f32 %v925, %v1149
    %v1156 = vmul.f32 %v926, %v1149
    %v1157 = vmul.f32 %v927, %v1149
    %v1158 = vmul.f32 %v928, %v1149
    %v1159 = vmul.f32 %v929, %v1149
    %v1160 = vmul.f32 %v930, %v1149
    %v1161 = vmul.f32 %v931, %v1149
    %v1162 = vmul.f32 %v932, %v1149
    %v1163 = vmul.f32 %v933, %v1149
    %v1164 = vmul.f32 %v934, %v1149
    %v1165 = vmul.f32 %v935, %v1149
    %v1166 = vmul.f32 %v936, %v1149
    %v1167 = vmul.f32 %v937, %v1149
    %v1168 = vmul.f32 %v938, %v1149
    %v1169 = vmul.f32 %v939, %v1149
    %v1170 = vmul.f32 %v940, %v1149
    %v1171 = vmul.f32 %v941, %v1149
    %v1172 = vmul.f32 %v942, %v1149
    %v1173 = vmul.f32 %v943, %v1149
    %v1174 = vmul.f32 %v944, %v1149
    %v1175 = vmul.f32 %v945, %v1149
    %v1176 = vmul.f32 %v946, %v1149
    %v1177 = vmul.f32 %v947, %v1149
    %v1178 = vmul.f32 %v948, %v1149
    %v1179 = vmul.f32 %v949, %v1149
    %v1180 = vmul.f32 %v950, %v1149
    %v1181 = vmul.f32 %v951, %v1149
    %v1182 = vpack.c.bf16 %v1151, %v1150
    %v1183 = vpack.c.bf16 %v1153, %v1152
    %v1184 = vpack.c.bf16 %v1155, %v1154
    %v1185 = vpack.c.bf16 %v1157, %v1156
    %v1186 = vpack.c.bf16 %v1159, %v1158
    %v1187 = vpack.c.bf16 %v1161, %v1160
    %v1188 = vpack.c.bf16 %v1163, %v1162
    %v1189 = vpack.c.bf16 %v1165, %v1164
    %v1190 = vpack.c.bf16 %v1167, %v1166
    %v1191 = vpack.c.bf16 %v1169, %v1168
    %v1192 = vpack.c.bf16 %v1171, %v1170
    %v1193 = vpack.c.bf16 %v1173, %v1172
    %v1194 = vpack.c.bf16 %v1175, %v1174
    %v1195 = vpack.c.bf16 %v1177, %v1176
    %v1196 = vpack.c.bf16 %v1179, %v1178
    %v1197 = vpack.c.bf16 %v1181, %v1180
    %v1214 = vunpack.c.l.b16 %v1182
    %v1215 = vunpack.c.h.b16 %v1182
    %v1216 = vunpack.c.l.b16 %v1183
    %v1217 = vunpack.c.h.b16 %v1183
    %v1218 = vunpack.c.l.b16 %v1184
    %v1219 = vunpack.c.h.b16 %v1184
    %v1220 = vunpack.c.l.b16 %v1185
    %v1221 = vunpack.c.h.b16 %v1185
    %v1222 = vunpack.c.l.b16 %v1186
    %v1223 = vunpack.c.h.b16 %v1186
    %v1224 = vunpack.c.l.b16 %v1187
    %v1225 = vunpack.c.h.b16 %v1187
    %v1226 = vunpack.c.l.b16 %v1188
    %v1227 = vunpack.c.h.b16 %v1188
    %v1228 = vunpack.c.l.b16 %v1189
    %v1229 = vunpack.c.h.b16 %v1189
    %v1230 = vunpack.c.l.b16 %v1190
    %v1231 = vunpack.c.h.b16 %v1190
    %v1232 = vunpack.c.l.b16 %v1191
    %v1233 = vunpack.c.h.b16 %v1191
    %v1234 = vunpack.c.l.b16 %v1192
    %v1235 = vunpack.c.h.b16 %v1192
    %v1236 = vunpack.c.l.b16 %v1193
    %v1237 = vunpack.c.h.b16 %v1193
    %v1238 = vunpack.c.l.b16 %v1194
    %v1239 = vunpack.c.h.b16 %v1194
    %v1240 = vunpack.c.l.b16 %v1195
    %v1241 = vunpack.c.h.b16 %v1195
    %v1242 = vunpack.c.l.b16 %v1196
    %v1243 = vunpack.c.h.b16 %v1196
    %v1244 = vunpack.c.l.b16 %v1197
    %v1245 = vunpack.c.h.b16 %v1197
    %v1246 = vpack.c.b16 %v1214, %v1214
    %v1247 = vpack.c.b16 %v1215, %v1215
    %v1248 = vpack.c.b16 %v1216, %v1216
    %v1249 = vpack.c.b16 %v1217, %v1217
    %v1250 = vpack.c.b16 %v1218, %v1218
    %v1251 = vpack.c.b16 %v1219, %v1219
    %v1252 = vpack.c.b16 %v1220, %v1220
    %v1253 = vpack.c.b16 %v1221, %v1221
    %v1254 = vpack.c.b16 %v1222, %v1222
    %v1255 = vpack.c.b16 %v1223, %v1223
    %v1256 = vpack.c.b16 %v1224, %v1224
    %v1257 = vpack.c.b16 %v1225, %v1225
    %v1258 = vpack.c.b16 %v1226, %v1226
    %v1259 = vpack.c.b16 %v1227, %v1227
    %v1260 = vpack.c.b16 %v1228, %v1228
    %v1261 = vpack.c.b16 %v1229, %v1229
    %v1262 = vpack.c.b16 %v1230, %v1230
    %v1263 = vpack.c.b16 %v1231, %v1231
    %v1264 = vpack.c.b16 %v1232, %v1232
    %v1265 = vpack.c.b16 %v1233, %v1233
    %v1266 = vpack.c.b16 %v1234, %v1234
    %v1267 = vpack.c.b16 %v1235, %v1235
    %v1268 = vpack.c.b16 %v1236, %v1236
    %v1269 = vpack.c.b16 %v1237, %v1237
    %v1270 = vpack.c.b16 %v1238, %v1238
    %v1271 = vpack.c.b16 %v1239, %v1239
    %v1272 = vpack.c.b16 %v1240, %v1240
    %v1273 = vpack.c.b16 %v1241, %v1241
    %v1274 = vpack.c.b16 %v1242, %v1242
    %v1275 = vpack.c.b16 %v1243, %v1243
    %v1276 = vpack.c.b16 %v1244, %v1244
    %v1277 = vpack.c.b16 %v1245, %v1245
    %1310 = vst [vmem:[#allocation3] sm:$0xf] %v1246
    %1311 = vst [vmem:[#allocation3 + $0x4] sm:$0xf] %v1247
    %1312 = vst [vmem:[#allocation3 + $0x8] sm:$0xf] %v1248
    %1313 = vst [vmem:[#allocation3 + $0xc] sm:$0xf] %v1249
    %1314 = vst [vmem:[#allocation3 + $0x10] sm:$0xf] %v1250
    %1315 = vst [vmem:[#allocation3 + $0x14] sm:$0xf] %v1251
    %1316 = vst [vmem:[#allocation3 + $0x18] sm:$0xf] %v1252
    %1317 = vst [vmem:[#allocation3 + $0x1c] sm:$0xf] %v1253
    %1318 = vst [vmem:[#allocation3 + $0x20] sm:$0xf] %v1254
    %1319 = vst [vmem:[#allocation3 + $0x24] sm:$0xf] %v1255
    %1320 = vst [vmem:[#allocation3 + $0x28] sm:$0xf] %v1256
    %1321 = vst [vmem:[#allocation3 + $0x2c] sm:$0xf] %v1257
    %1322 = vst [vmem:[#allocation3 + $0x30] sm:$0xf] %v1258
    %1323 = vst [vmem:[#allocation3 + $0x34] sm:$0xf] %v1259
    %1324 = vst [vmem:[#allocation3 + $0x38] sm:$0xf] %v1260
    %1325 = vst [vmem:[#allocation3 + $0x3c] sm:$0xf] %v1261
    %1326 = vst [vmem:[#allocation3 + $0x40] sm:$0xf] %v1262
    %1327 = vst [vmem:[#allocation3 + $0x44] sm:$0xf] %v1263
    %1328 = vst [vmem:[#allocation3 + $0x48] sm:$0xf] %v1264
    %1329 = vst [vmem:[#allocation3 + $0x4c] sm:$0xf] %v1265
    %1330 = vst [vmem:[#allocation3 + $0x50] sm:$0xf] %v1266
    %1331 = vst [vmem:[#allocation3 + $0x54] sm:$0xf] %v1267
    %1332 = vst [vmem:[#allocation3 + $0x58] sm:$0xf] %v1268
    %1333 = vst [vmem:[#allocation3 + $0x5c] sm:$0xf] %v1269
    %1334 = vst [vmem:[#allocation3 + $0x60] sm:$0xf] %v1270
    %1335 = vst [vmem:[#allocation3 + $0x64] sm:$0xf] %v1271
    %1336 = vst [vmem:[#allocation3 + $0x68] sm:$0xf] %v1272
    %1337 = vst [vmem:[#allocation3 + $0x6c] sm:$0xf] %v1273
    %1338 = vst [vmem:[#allocation3 + $0x70] sm:$0xf] %v1274
    %1339 = vst [vmem:[#allocation3 + $0x74] sm:$0xf] %v1275
    %1340 = vst [vmem:[#allocation3 + $0x78] sm:$0xf] %v1276
    %1341 = vst [vmem:[#allocation3 + $0x7c] sm:$0xf] %v1277
    %v1342 = vpack.c.bf16 %v1113, %v1112
    %v1343 = vpack.c.bf16 %v1115, %v1114
    %v1344 = vpack.c.bf16 %v1117, %v1116
    %v1345 = vpack.c.bf16 %v1119, %v1118
    %v1346 = vpack.c.bf16 %v1121, %v1120
    %v1347 = vpack.c.bf16 %v1123, %v1122
    %v1348 = vpack.c.bf16 %v1125, %v1124
    %v1349 = vpack.c.bf16 %v1127, %v1126
    %v1350 = vpack.c.bf16 %v1129, %v1128
    %v1351 = vpack.c.bf16 %v1131, %v1130
    %v1352 = vpack.c.bf16 %v1133, %v1132
    %v1353 = vpack.c.bf16 %v1135, %v1134
    %v1354 = vpack.c.bf16 %v1137, %v1136
    %v1355 = vpack.c.bf16 %v1139, %v1138
    %v1356 = vpack.c.bf16 %v1141, %v1140
    %v1357 = vpack.c.bf16 %v1143, %v1142
    %v1374 = vunpack.c.l.b16 %v1342
    %v1375 = vunpack.c.h.b16 %v1342
    %v1376 = vunpack.c.l.b16 %v1343
    %v1377 = vunpack.c.h.b16 %v1343
    %v1378 = vunpack.c.l.b16 %v1344
    %v1379 = vunpack.c.h.b16 %v1344
    %v1380 = vunpack.c.l.b16 %v1345
    %v1381 = vunpack.c.h.b16 %v1345
    %v1382 = vunpack.c.l.b16 %v1346
    %v1383 = vunpack.c.h.b16 %v1346
    %v1384 = vunpack.c.l.b16 %v1347
    %v1385 = vunpack.c.h.b16 %v1347
    %v1386 = vunpack.c.l.b16 %v1348
    %v1387 = vunpack.c.h.b16 %v1348
    %v1388 = vunpack.c.l.b16 %v1349
    %v1389 = vunpack.c.h.b16 %v1349
    %v1390 = vunpack.c.l.b16 %v1350
    %v1391 = vunpack.c.h.b16 %v1350
    %v1392 = vunpack.c.l.b16 %v1351
    %v1393 = vunpack.c.h.b16 %v1351
    %v1394 = vunpack.c.l.b16 %v1352
    %v1395 = vunpack.c.h.b16 %v1352
    %v1396 = vunpack.c.l.b16 %v1353
    %v1397 = vunpack.c.h.b16 %v1353
    %v1398 = vunpack.c.l.b16 %v1354
    %v1399 = vunpack.c.h.b16 %v1354
    %v1400 = vunpack.c.l.b16 %v1355
    %v1401 = vunpack.c.h.b16 %v1355
    %v1402 = vunpack.c.l.b16 %v1356
    %v1403 = vunpack.c.h.b16 %v1356
    %v1404 = vunpack.c.l.b16 %v1357
    %v1405 = vunpack.c.h.b16 %v1357
    %v1406 = vpack.c.b16 %v1374, %v1374
    %v1407 = vpack.c.b16 %v1375, %v1375
    %v1408 = vpack.c.b16 %v1376, %v1376
    %v1409 = vpack.c.b16 %v1377, %v1377
    %v1410 = vpack.c.b16 %v1378, %v1378
    %v1411 = vpack.c.b16 %v1379, %v1379
    %v1412 = vpack.c.b16 %v1380, %v1380
    %v1413 = vpack.c.b16 %v1381, %v1381
    %v1414 = vpack.c.b16 %v1382, %v1382
    %v1415 = vpack.c.b16 %v1383, %v1383
    %v1416 = vpack.c.b16 %v1384, %v1384
    %v1417 = vpack.c.b16 %v1385, %v1385
    %v1418 = vpack.c.b16 %v1386, %v1386
    %v1419 = vpack.c.b16 %v1387, %v1387
    %v1420 = vpack.c.b16 %v1388, %v1388
    %v1421 = vpack.c.b16 %v1389, %v1389
    %v1422 = vpack.c.b16 %v1390, %v1390
    %v1423 = vpack.c.b16 %v1391, %v1391
    %v1424 = vpack.c.b16 %v1392, %v1392
    %v1425 = vpack.c.b16 %v1393, %v1393
    %v1426 = vpack.c.b16 %v1394, %v1394
    %v1427 = vpack.c.b16 %v1395, %v1395
    %v1428 = vpack.c.b16 %v1396, %v1396
    %v1429 = vpack.c.b16 %v1397, %v1397
    %v1430 = vpack.c.b16 %v1398, %v1398
    %v1431 = vpack.c.b16 %v1399, %v1399
    %v1432 = vpack.c.b16 %v1400, %v1400
    %v1433 = vpack.c.b16 %v1401, %v1401
    %v1434 = vpack.c.b16 %v1402, %v1402
    %v1435 = vpack.c.b16 %v1403, %v1403
    %v1436 = vpack.c.b16 %v1404, %v1404
    %v1437 = vpack.c.b16 %v1405, %v1405
    %1470 = vst [vmem:[#allocation5] sm:$0xf] %v1406
    %1471 = vst [vmem:[#allocation5 + $0x4] sm:$0xf] %v1407
    %1472 = vst [vmem:[#allocation5 + $0x8] sm:$0xf] %v1408
    %1473 = vst [vmem:[#allocation5 + $0xc] sm:$0xf] %v1409
    %1474 = vst [vmem:[#allocation5 + $0x10] sm:$0xf] %v1410
    %1475 = vst [vmem:[#allocation5 + $0x14] sm:$0xf] %v1411
    %1476 = vst [vmem:[#allocation5 + $0x18] sm:$0xf] %v1412
    %1477 = vst [vmem:[#allocation5 + $0x1c] sm:$0xf] %v1413
    %1478 = vst [vmem:[#allocation5 + $0x20] sm:$0xf] %v1414
    %1479 = vst [vmem:[#allocation5 + $0x24] sm:$0xf] %v1415
    %1480 = vst [vmem:[#allocation5 + $0x28] sm:$0xf] %v1416
    %1481 = vst [vmem:[#allocation5 + $0x2c] sm:$0xf] %v1417
    %1482 = vst [vmem:[#allocation5 + $0x30] sm:$0xf] %v1418
    %1483 = vst [vmem:[#allocation5 + $0x34] sm:$0xf] %v1419
    %1484 = vst [vmem:[#allocation5 + $0x38] sm:$0xf] %v1420
    %1485 = vst [vmem:[#allocation5 + $0x3c] sm:$0xf] %v1421
    %1486 = vst [vmem:[#allocation5 + $0x40] sm:$0xf] %v1422
    %1487 = vst [vmem:[#allocation5 + $0x44] sm:$0xf] %v1423
    %1488 = vst [vmem:[#allocation5 + $0x48] sm:$0xf] %v1424
    %1489 = vst [vmem:[#allocation5 + $0x4c] sm:$0xf] %v1425
    %1490 = vst [vmem:[#allocation5 + $0x50] sm:$0xf] %v1426
    %1491 = vst [vmem:[#allocation5 + $0x54] sm:$0xf] %v1427
    %1492 = vst [vmem:[#allocation5 + $0x58] sm:$0xf] %v1428
    %1493 = vst [vmem:[#allocation5 + $0x5c] sm:$0xf] %v1429
    %1494 = vst [vmem:[#allocation5 + $0x60] sm:$0xf] %v1430
    %1495 = vst [vmem:[#allocation5 + $0x64] sm:$0xf] %v1431
    %1496 = vst [vmem:[#allocation5 + $0x68] sm:$0xf] %v1432
    %1497 = vst [vmem:[#allocation5 + $0x6c] sm:$0xf] %v1433
    %1498 = vst [vmem:[#allocation5 + $0x70] sm:$0xf] %v1434
    %1499 = vst [vmem:[#allocation5 + $0x74] sm:$0xf] %v1435
    %1500 = vst [vmem:[#allocation5 + $0x78] sm:$0xf] %v1436
    %1501 = vst [vmem:[#allocation5 + $0x7c] sm:$0xf] %v1437
    // Predicated region
    $region30: #{tpu_custom_call.1} parent=1 // pred_check
      _
    $region31: #{tpu_custom_call.1} parent=1 // pred_check_branch
      %1503 = sbr.rel (0) target = $region33
    $region32: #{tpu_custom_call.1} parent=1 // pred_region
      %s1505 = ssub.s32 2048, 2048
      %1506 = vsyncadd [#allocation4], %s1505
      %s1507 = sshll.u32 [#allocation3], 4
      %s1508 = int_to_ptr.vmem [resolvable:$true] %s1507
      %1513 = dma.vmem_to_hbm [thread:$0]  %s1508, 2048, %s7, [#allocation4], 64, 64, 4
    $region33: #{tpu_custom_call.1} parent=1 // pred_fallthru
      _
    // Predicated region
    $region34: #{tpu_custom_call.1} parent=1 // pred_check
      _
    $region35: #{tpu_custom_call.1} parent=1 // pred_check_branch
      %1515 = sbr.rel (0) target = $region37
    $region36: #{tpu_custom_call.1} parent=1 // pred_region
      %s1517 = ssub.s32 2048, 2048
      %1518 = vsyncadd [#allocation6], %s1517
      %s1519 = sshll.u32 [#allocation5], 4
      %s1520 = int_to_ptr.vmem [resolvable:$true] %s1519
      %1525 = dma.vmem_to_hbm [thread:$0]  %s1520, 2048, %s8, [#allocation6], 64, 64, 4
    $region37: #{tpu_custom_call.1} parent=1 // pred_fallthru
      _
    // Predicated region
    $region38: #{tpu_custom_call.1} parent=1 // pred_check
      _
    $region39: #{tpu_custom_call.1} parent=1 // pred_check_branch
      %1527 = sbr.rel (0) target = $region41
    $region40: #{tpu_custom_call.1} parent=1 // pred_region
      %1528 = dma.done [#allocation4], 2048
    $region41: #{tpu_custom_call.1} parent=1 // pred_fallthru
      _
    // Predicated region
    $region42: #{tpu_custom_call.1} parent=1 // pred_check
      _
    $region43: #{tpu_custom_call.1} parent=1 // pred_check_branch
      %1530 = sbr.rel (0) target = $region45
    $region44: #{tpu_custom_call.1} parent=1 // pred_region
      %1531 = dma.done [#allocation6], 2048
    $region45: #{tpu_custom_call.1} parent=1 // pred_fallthru
      _
    %1532 = vsyncpa [#allocation4], 1
    %1533 = vsyncpa [#allocation6], 1

</llo_original>
